<compile_context>
chip_gen: v7x
topology: tpu7x:2x2x1
jax: 0.10.0
libtpu: 0.0.40
codegen_flags: <defaults>
</compile_context>

<pallas_src>
import functools

import jax
import jax.numpy as jnp
from jax import lax
from jax.experimental import pallas as pl
from jax.experimental.pallas import tpu as pltpu


def _round_up(x, m):
    return (x + m - 1) // m * m


def _vmem_capacity_bytes():
    try:
        return int(pltpu.get_tpu_info().vmem_capacity_bytes)
    except Exception:
        return 64 * 1024 * 1024  # conservative default (v7x-sized VMEM)


def _self_attn_kernel(x_ref, a_ref, wv_ref, gamma_ref, out_ref,
                      *, C, N, N_pad, TJ, fast_math):
    """One (batch b, query-tile j) grid step.

    x_ref:     (1, C+1, N_pad)  input with a trailing ones-row (bias channel)
    a_ref:     (C+1, C+1)       fused projection (Wq_a^T Wk_a)^T
    wv_ref:    (C, C+1)         [Wv | bv]
    gamma_ref: (1, 1)           gamma scalar (SMEM)
    out_ref:   (1, C, N_pad)    resident accumulator -> gamma*acc + x
    """
    j = pl.program_id(1)
    mxu_dt = jnp.bfloat16 if fast_math else jnp.float32

    # ---- zero the resident output block once per batch element ------------
    @pl.when(j == 0)
    def _():
        out_ref[...] = jnp.zeros_like(out_ref)

    # ---- this tile's query columns of x ------------------------------------
    j0 = pl.multiple_of(j * TJ, TJ)
    x_t = x_ref[0, :, pl.ds(j0, TJ)]                            # (C+1, TJ)

    # xa[r, c'] = sum_c x[c, j0+r] * A[c, c']   (A = Wq_a^T Wk_a, passed as A^T)
    # so energy = xa @ x reproduces q^T k exactly, biases included.
    xa = lax.dot_general(x_t, a_ref[...], (((0,), (1,)), ((), ())),
                         preferred_element_type=jnp.float32)    # (TJ, C+1)
    v_t = lax.dot_general(x_t, wv_ref[...], (((0,), (1,)), ((), ())),
                          preferred_element_type=jnp.float32)   # (TJ, C)

    energy = jnp.dot(xa.astype(mxu_dt), x_ref[0],
                     preferred_element_type=jnp.float32)        # (TJ, N_pad)

    # Additive column mask before the max: padded key columns -> -1e30.
    if N != N_pad:
        col = lax.broadcasted_iota(jnp.int32, (1, N_pad), 1)
        energy = energy + jnp.where(col < N, 0.0, -1e30)

    # Row softmax, kept unnormalized; normalization is folded into v.
    m = jnp.max(energy, axis=-1, keepdims=True)                 # (TJ, 1)
    p_dt = jnp.bfloat16 if fast_math else jnp.float32
    p = jnp.exp((energy - m).astype(p_dt))                      # (TJ, N_pad)
    l = jnp.sum(p.astype(jnp.float32), axis=-1, keepdims=True)  # (TJ, 1)

    inv_l = pl.reciprocal(l, approx=fast_math)
    if N != N_pad:
        # Padded query rows (last tile only) contribute nothing: fold the row
        # mask into 1/l -> a (TJ, 1) select instead of a full-slab op.
        row = lax.broadcasted_iota(jnp.int32, (TJ, 1), 0) + j0
        inv_l = jnp.where(row < N, inv_l, 0.0)
    v_scaled = (v_t * inv_l).astype(mxu_dt)                     # (TJ, C)

    # out[c, i] += sum_r v_scaled[r, c] * p[r, i]
    out_ref[0] += lax.dot_general(
        v_scaled, p, (((0,), (0,)), ((), ())),
        preferred_element_type=jnp.float32)

    # ---- finalize on the last tile -----------------------------------------
    @pl.when(j == pl.num_programs(1) - 1)
    def _():
        out_ref[0] = (gamma_ref[0, 0] * out_ref[0]
                      + x_ref[0, :C, :].astype(jnp.float32))


def _pick_query_tile(N, C, fast_math, vmem_limit):
    """Largest 128/256-aligned query tile whose live slabs fit the VMEM limit."""
    n128 = _round_up(N, 128)
    xb = 2 if fast_math else 4
    pb = 2 if fast_math else 4
    # Double-buffered resident blocks (x input, f32 output); weights negligible.
    resident = 2 * ((C + 1) * n128 * xb + C * n128 * 4)
    # Per query row: energy (f32) + p + f32 copy for the row sum + ~3 f32
    # slabs of headroom for shift/mask/compiler temps.
    per_row = (4 + pb + 4 + 3 * 4) * n128
    tj = (vmem_limit - resident) // max(per_row, 1)
    if tj >= 256:
        tj = (tj // 256) * 256   # fill the 256x256 MXU on v6e/v7x
    else:
        tj = 128
    return int(min(max(tj, 128), n128))


def self_attn_pallas(x_nchw, wq, bq, wk, bk, wv, bv, gamma, *,
                     tj=None, fast_math=False):
    """out = gamma * bmm(value_conv(x), softmax(q^T k)) + x, as in Self_Attn."""
    B, C, W, H = x_nchw.shape
    C4 = wq.shape[0]
    N = W * H
    f32 = jnp.float32

    # Fold biases into an augmented channel (ones row on x, bias column on W),
    # then fuse query/key:  energy = x_aug^T (Wq_a^T Wk_a) x_aug.
    wq_a = jnp.concatenate([wq, jnp.reshape(bq, (C4, 1))], axis=1).astype(f32)
    wk_a = jnp.concatenate([wk, jnp.reshape(bk, (C4, 1))], axis=1).astype(f32)
    wv_a = jnp.concatenate([wv, jnp.reshape(bv, (C, 1))], axis=1).astype(f32)
    a_t = wk_a.T @ wq_a            # (C+1, C+1) == (Wq_a^T Wk_a)^T

    # Query-tile size from the scoped VMEM budget of the local TPU generation.
    vmem_cap = _vmem_capacity_bytes()
    vmem_limit = int(min(0.75 * vmem_cap, 100 * 2**20))
    n128 = _round_up(N, 128)
    if tj is None:
        tj = _pick_query_tile(N, C, fast_math, vmem_limit)
    tj = int(min(max(128, _round_up(int(tj), 128)), n128))
    N_pad = _round_up(N, tj)
    NJ = N_pad // tj

    # fast_math: MXU gets bf16 operands with f32 accumulation; passing x in
    # bf16 avoids re-casting the (C+1, N_pad) slab on every query tile.
    x_dt = jnp.bfloat16 if fast_math else f32
    xf = x_nchw.reshape(B, C, N).astype(f32)
    x_aug = jnp.concatenate(
        [jnp.pad(xf, ((0, 0), (0, 0), (0, N_pad - N))),
         jnp.ones((B, 1, N_pad), f32)], axis=1).astype(x_dt)     # (B, C+1, N_pad)
    gamma2 = jnp.asarray(gamma, f32).reshape(1, 1)

    kernel = functools.partial(_self_attn_kernel, C=C, N=N, N_pad=N_pad,
                               TJ=tj, fast_math=fast_math)

    out_pad = pl.pallas_call(
        kernel,
        out_shape=jax.ShapeDtypeStruct((B, C, N_pad), jnp.float32),
        grid=(B, NJ),
        in_specs=[
            pl.BlockSpec((1, C + 1, N_pad), lambda b, j: (b, 0, 0)),  # x (resident over j)
            pl.BlockSpec((C + 1, C + 1), lambda b, j: (0, 0)),        # fused (Wq^T Wk)^T
            pl.BlockSpec((C, C + 1), lambda b, j: (0, 0)),            # [Wv | bv]
            pl.BlockSpec(memory_space=pltpu.MemorySpace.SMEM),        # gamma scalar
        ],
        out_specs=pl.BlockSpec((1, C, N_pad), lambda b, j: (b, 0, 0)),
        compiler_params=pltpu.CompilerParams(
            dimension_semantics=("parallel", "arbitrary"),
            vmem_limit_bytes=vmem_limit,
        ),
    )(x_aug, a_t.astype(x_dt), wv_a.astype(x_dt), gamma2)

    return out_pad[:, :, :N].reshape(B, C, W, H)


def self_attn_reference(x, wq, bq, wk, bk, wv, bv, gamma):
    """Pure-JAX reference mirroring the PyTorch forward."""
    B, C, W, H = x.shape
    N = W * H
    xf = x.reshape(B, C, N)
    q = jnp.einsum('oc,bcn->bon', wq, xf) + jnp.reshape(bq, (1, -1, 1))
    k = jnp.einsum('oc,bcn->bon', wk, xf) + jnp.reshape(bk, (1, -1, 1))
    v = jnp.einsum('oc,bcn->bon', wv, xf) + jnp.reshape(bv, (1, -1, 1))
    energy = jnp.einsum('bci,bcj->bij', q, k)                    # (B, N, N)
    attn = jax.nn.softmax(energy, axis=-1)
    o = jnp.einsum('bcj,bji->bci', v, attn)                      # bmm(value, attn)
    out = jnp.asarray(gamma).reshape(()) * o + xf
    return out.reshape(B, C, W, H)


if __name__ == "__main__":
    def init_params(key, C):
        C4 = C // 4
        kq, kbq, kk, kbk, kv, kbv = jax.random.split(key, 6)
        return (jax.random.normal(kq, (C4, C), jnp.float32) * 0.1,
                jax.random.normal(kbq, (C4,), jnp.float32) * 0.1,
                jax.random.normal(kk, (C4, C), jnp.float32) * 0.1,
                jax.random.normal(kbk, (C4,), jnp.float32) * 0.1,
                jax.random.normal(kv, (C, C), jnp.float32) * 0.1,
                jax.random.normal(kbv, (C,), jnp.float32) * 0.1)

    key = jax.random.PRNGKey(0)
    kp, kx1, kx2 = jax.random.split(key, 3)
    C = 8                                   # in_dim (must be divisible by 4)
    params = init_params(kp, C)
    # PyTorch inits gamma to 0 (out == x); use a nonzero value so the
    # attention path is actually exercised.
    gamma = jnp.full((1,), 0.5, jnp.float32)

    # 1) N = 16*16 = 256: lane-aligned, single query tile, exact f32 path.
    x1 = jax.random.normal(kx1, (2, C, 16, 16), jnp.float32)
    out1 = jax.block_until_ready(self_attn_pallas(x1, *params, gamma))
    ref1 = self_attn_reference(x1, *params, gamma)
    err1 = float(jnp.max(jnp.abs(out1 - ref1)))
    assert out1.shape == x1.shape and err1 < 1e-3, err1

    # 2) N = 20*20 = 400 -> padded to 512, four 128-row query tiles:
    #    exercises padding masks + multi-tile output accumulation.
    x2 = jax.random.normal(kx2, (1, C, 20, 20), jnp.float32)
    out2 = jax.block_until_ready(self_attn_pallas(x2, *params, gamma, tj=128))
    ref2 = self_attn_reference(x2, *params, gamma)
    err2 = float(jnp.max(jnp.abs(out2 - ref2)))
    assert out2.shape == x2.shape and err2 < 1e-3, err2

    # 3) fast-math path: bf16 MXU operands, bf16 exp slab, approx reciprocal.
    out3 = jax.block_until_ready(self_attn_pallas(x1, *params, gamma,
                                                  fast_math=True))
    err3 = float(jnp.max(jnp.abs(out3 - ref1)))
    assert err3 < 3e-2, err3

    print("KERNEL_OK")
</pallas_src>

<mosaic_0001>
module attributes {stable_mosaic.version = 11 : i64} {
  func.func @_self_attn_kernel(%arg0: i32, %arg1: i32, %arg2: memref<1x9x256xf32, #tpu.memory_space<vmem>>, %arg3: memref<9x9xf32, #tpu.memory_space<vmem>>, %arg4: memref<8x9xf32, #tpu.memory_space<vmem>>, %arg5: memref<1x1xf32, #tpu.memory_space<smem>>, %arg6: memref<1x8x256xf32, #tpu.memory_space<vmem>>) attributes {dimension_semantics = [#tpu.dimension_semantics<parallel>, #tpu.dimension_semantics<arbitrary>], iteration_bounds = array<i64: 2, 1>, scalar_prefetch = 0 : i64, scratch_operands = 0 : i64, tpu.core_type = #tpu.core_type<tc>, window_params = [{transform_indices = @transform_0, window_bounds = array<i64: 1, 9, 256>}, {pipeline_mode = #tpu.pipeline_mode<synchronous>, transform_indices = @transform_1, window_bounds = array<i64: 9, 9>}, {pipeline_mode = #tpu.pipeline_mode<synchronous>, transform_indices = @transform_2, window_bounds = array<i64: 8, 9>}, {transform_indices = @transform_3, window_bounds = array<i64: 1, 1>}, {transform_indices = @transform_4, window_bounds = array<i64: 1, 8, 256>}]} {
    %c0_i32 = arith.constant 0 : i32
    %0 = arith.cmpi eq, %arg1, %c0_i32 : i32
    %1 = arith.extui %0 : i1 to i32
    %c0_i32_0 = arith.constant 0 : i32
    %2 = arith.cmpi ne, %1, %c0_i32_0 : i32
    scf.if %2 {
      %cst_22 = arith.constant 0.000000e+00 : f32
      %35 = vector.broadcast %cst_22 : f32 to vector<1x8x256xf32>
      %c0_23 = arith.constant 0 : index
      %c0_24 = arith.constant 0 : index
      %c0_25 = arith.constant 0 : index
      %36 = vector.load %arg6[%c0_23, %c0_24, %c0_25] : memref<1x8x256xf32, #tpu.memory_space<vmem>>, vector<1x8x256xf32>
      tpu.vector_store %arg6[%c0_23, %c0_24, %c0_25], %35 {strides = array<i32>} : memref<1x8x256xf32, #tpu.memory_space<vmem>>, vector<1x8x256xf32>,
    } else {
    }
    %c256_i32 = arith.constant 256 : i32
    %3 = arith.muli %arg1, %c256_i32 : i32
    %4 = tpu.assume_multiple %3, 256 : i32
    %c0 = arith.constant 0 : index
    %c0_1 = arith.constant 0 : index
    %5 = arith.index_cast %4 : i32 to index
    %6 = vector.load %arg2[%c0, %c0_1, %5] : memref<1x9x256xf32, #tpu.memory_space<vmem>>, vector<1x9x256xf32>
    %7 = vector.shape_cast %6 : vector<1x9x256xf32> to vector<9x256xf32>
    %c0_2 = arith.constant 0 : index
    %c0_3 = arith.constant 0 : index
    %8 = vector.load %arg3[%c0_2, %c0_3] : memref<9x9xf32, #tpu.memory_space<vmem>>, vector<9x9xf32>
    %cst = arith.constant dense<0.000000e+00> : vector<256x9xf32>
    %9 = tpu.matmul %7, %8, %cst {dimension_numbers = #tpu.dot_dimension_numbers<[0], [1], [1], [0], [0, 1, 1, 0], [], []>} : vector<9x256xf32>, vector<9x9xf32>, vector<256x9xf32> -> vector<256x9xf32>
    %c0_4 = arith.constant 0 : index
    %c0_5 = arith.constant 0 : index
    %10 = vector.load %arg4[%c0_4, %c0_5] : memref<8x9xf32, #tpu.memory_space<vmem>>, vector<8x9xf32>
    %cst_6 = arith.constant dense<0.000000e+00> : vector<256x8xf32>
    %11 = tpu.matmul %7, %10, %cst_6 {dimension_numbers = #tpu.dot_dimension_numbers<[0], [1], [1], [0], [0, 1, 1, 0], [], []>} : vector<9x256xf32>, vector<8x9xf32>, vector<256x8xf32> -> vector<256x8xf32>
    %c0_7 = arith.constant 0 : index
    %c0_8 = arith.constant 0 : index
    %c0_9 = arith.constant 0 : index
    %12 = vector.load %arg2[%c0_7, %c0_8, %c0_9] : memref<1x9x256xf32, #tpu.memory_space<vmem>>, vector<1x9x256xf32>
    %13 = vector.shape_cast %12 : vector<1x9x256xf32> to vector<9x256xf32>
    %cst_10 = arith.constant dense<0.000000e+00> : vector<256x256xf32>
    %14 = tpu.matmul %9, %13, %cst_10 {dimension_numbers = #tpu.dot_dimension_numbers<[1], [0], [0], [1], [0, 0, 1, 1], [], []>} : vector<256x9xf32>, vector<9x256xf32>, vector<256x256xf32> -> vector<256x256xf32>
    %cst_11 = arith.constant dense<0xFF800000> : vector<256xf32>
    %15 = vector.multi_reduction <maximumf>, %14, %cst_11 [1] : vector<256x256xf32> to vector<256xf32>
    %16 = vector.shape_cast %15 : vector<256xf32> to vector<256x1xf32>
    %17 = vector.broadcast %16 : vector<256x1xf32> to vector<256x256xf32>
    %18 = arith.subf %14, %17 : vector<256x256xf32>
    %19 = math.exp %18 : vector<256x256xf32>
    %cst_12 = arith.constant dense<0.000000e+00> : vector<256xf32>
    %20 = vector.multi_reduction <add>, %19, %cst_12 [1] : vector<256x256xf32> to vector<256xf32>
    %21 = vector.shape_cast %20 : vector<256xf32> to vector<256x1xf32>
    %22 = tpu.reciprocal %21 : vector<256x1xf32> -> vector<256x1xf32>
    %23 = vector.broadcast %22 : vector<256x1xf32> to vector<256x8xf32>
    %24 = arith.mulf %11, %23 : vector<256x8xf32>
    %c0_13 = arith.constant 0 : index
    %c0_14 = arith.constant 0 : index
    %c0_15 = arith.constant 0 : index
    %25 = vector.load %arg6[%c0_13, %c0_14, %c0_15] : memref<1x8x256xf32, #tpu.memory_space<vmem>>, vector<1x8x256xf32>
    %26 = vector.shape_cast %25 : vector<1x8x256xf32> to vector<8x256xf32>
    %cst_16 = arith.constant dense<0.000000e+00> : vector<8x256xf32>
    %27 = tpu.matmul %24, %19, %cst_16 {dimension_numbers = #tpu.dot_dimension_numbers<[0], [0], [1], [1], [0, 1, 1, 1], [], []>} : vector<256x8xf32>, vector<256x256xf32>, vector<8x256xf32> -> vector<8x256xf32>
    %28 = arith.addf %26, %27 : vector<8x256xf32>
    %c0_17 = arith.constant 0 : index
    %c0_18 = arith.constant 0 : index
    %c0_19 = arith.constant 0 : index
    %29 = vector.load %arg6[%c0_17, %c0_18, %c0_19] : memref<1x8x256xf32, #tpu.memory_space<vmem>>, vector<1x8x256xf32>
    %30 = vector.shape_cast %29 : vector<1x8x256xf32> to vector<8x256xf32>
    %31 = vector.shape_cast %28 : vector<8x256xf32> to vector<1x8x256xf32>
    tpu.vector_store %arg6[%c0_17, %c0_18, %c0_19], %31 {strides = array<i32>} : memref<1x8x256xf32, #tpu.memory_space<vmem>>, vector<1x8x256xf32>,
    %c0_i32_20 = arith.constant 0 : i32
    %32 = arith.cmpi eq, %arg1, %c0_i32_20 : i32
    %33 = arith.extui %32 : i1 to i32
    %c0_i32_21 = arith.constant 0 : i32
    %34 = arith.cmpi ne, %33, %c0_i32_21 : i32
    scf.if %34 {
      %c0_22 = arith.constant 0 : index
      %c0_23 = arith.constant 0 : index
      %35 = memref.load %arg5[%c0_22, %c0_23] : memref<1x1xf32, #tpu.memory_space<smem>>
      %c0_24 = arith.constant 0 : index
      %c0_25 = arith.constant 0 : index
      %c0_26 = arith.constant 0 : index
      %36 = vector.load %arg6[%c0_24, %c0_25, %c0_26] : memref<1x8x256xf32, #tpu.memory_space<vmem>>, vector<1x8x256xf32>
      %37 = vector.shape_cast %36 : vector<1x8x256xf32> to vector<8x256xf32>
      %38 = vector.broadcast %35 : f32 to vector<8x256xf32>
      %39 = arith.mulf %38, %37 : vector<8x256xf32>
      %c0_27 = arith.constant 0 : index
      %c0_28 = arith.constant 0 : index
      %c0_29 = arith.constant 0 : index
      %40 = vector.load %arg2[%c0_27, %c0_28, %c0_29] : memref<1x9x256xf32, #tpu.memory_space<vmem>>, vector<1x8x256xf32>
      %41 = vector.shape_cast %40 : vector<1x8x256xf32> to vector<8x256xf32>
      %42 = arith.addf %39, %41 : vector<8x256xf32>
      %c0_30 = arith.constant 0 : index
      %c0_31 = arith.constant 0 : index
      %c0_32 = arith.constant 0 : index
      %43 = vector.load %arg6[%c0_30, %c0_31, %c0_32] : memref<1x8x256xf32, #tpu.memory_space<vmem>>, vector<1x8x256xf32>
      %44 = vector.shape_cast %43 : vector<1x8x256xf32> to vector<8x256xf32>
      %45 = vector.shape_cast %42 : vector<8x256xf32> to vector<1x8x256xf32>
      tpu.vector_store %arg6[%c0_30, %c0_31, %c0_32], %45 {strides = array<i32>} : memref<1x8x256xf32, #tpu.memory_space<vmem>>, vector<1x8x256xf32>,
    } else {
    }
    return
  }
  func.func @transform_0(%arg0: i32, %arg1: i32) -> (i32, i32, i32) {
    %c0_i32 = arith.constant 0 : i32
    %c0_i32_0 = arith.constant 0 : i32
    %c0_i32_1 = arith.constant 0 : i32
    return %arg0, %c0_i32, %c0_i32_0 : i32, i32, i32
  }
  func.func @transform_1(%arg0: i32, %arg1: i32) -> (i32, i32) {
    %c0_i32 = arith.constant 0 : i32
    %c0_i32_0 = arith.constant 0 : i32
    %c0_i32_1 = arith.constant 0 : i32
    return %c0_i32, %c0_i32_0 : i32, i32
  }
  func.func @transform_2(%arg0: i32, %arg1: i32) -> (i32, i32) {
    %c0_i32 = arith.constant 0 : i32
    %c0_i32_0 = arith.constant 0 : i32
    %c0_i32_1 = arith.constant 0 : i32
    return %c0_i32, %c0_i32_0 : i32, i32
  }
  func.func @transform_3(%arg0: i32, %arg1: i32) -> (i32, i32) {
    %c0_i32 = arith.constant 0 : i32
    %c0_i32_0 = arith.constant 0 : i32
    %c0_i32_1 = arith.constant 0 : i32
    return %c0_i32, %c0_i32_0 : i32, i32
  }
  func.func @transform_4(%arg0: i32, %arg1: i32) -> (i32, i32, i32) {
    %c0_i32 = arith.constant 0 : i32
    %c0_i32_0 = arith.constant 0 : i32
    %c0_i32_1 = arith.constant 0 : i32
    return %arg0, %c0_i32, %c0_i32_0 : i32, i32, i32
  }
}

</mosaic_0001>

<llo_original>
// kernel: tpu_custom_call.1
$region0: #{tpu_custom_call.1}
  #allocation0 [shape = 'u32[]', space=smem, size = 0x4, offset = 0x4, fixed_abs, tag = 'smem constant byte address 0x4 - core index']
  #allocation1 [shape = 'u32[144,128]{1,0:T(1,128)}', space=vmem, size = 0x12000, scoped, tag = 'internal scratch']
  #allocation2 [shape = 'f32[1,1]{1,0:T(1,128)S(6)}', space=smem, size = 0x200, scoped, tag = 'scoped memory for tpu_custom_call.1']
  %s0 = inlined_call_operand.vmem [shape: f32[2,9,256], index: 0, kind: input, shape index: {}]
  %s1 = inlined_call_operand.vmem [shape: f32[9,9], index: 1, kind: input, shape index: {}]
  %s2 = inlined_call_operand.vmem [shape: f32[8,9], index: 2, kind: input, shape index: {}]
  %s3 = inlined_call_operand.<no memory space> [shape: f32[1,1], index: 3, kind: input, shape index: {}]
  %s4 = inlined_call_operand.hbm [shape: f32[2,8,256], index: 4, kind: output, shape index: {}]
  %s5 = sld [smem:[#allocation0]]
  $region57: #{tpu_custom_call.1} parent=0
    _
  %s7 = ssub.s32 1, %s5
  %s8 = scalar_select 0, %s7, %s5
  %9 = sst [smem:[#allocation2]] %s3
  $region1: #{tpu_custom_call.1} parent=0
    #allocation3 [shape = 'u8[16384]{0}', space=vmem, size = 0x4000, scoped, tag = 'output window, operand 0']
    #allocation4 [shape = 's32[2]{0}', space=sflag, size = 0x8, scoped, tag = 'scoped memory for tpu_custom_call.1']
    %10 = vsyncpa [#allocation4], 0
    %s11 = scalar_lea.sflag [#allocation4], 1
    %12 = vsyncpa %s11, 0
    loop: start=0, step=1, limit=4
    $region2: #{tpu_custom_call.1} parent=1 // loop_pre_header
      _
    $region3: #{tpu_custom_call.1} parent=1 // loop_header
      %s14 = sphi 0, %s18
      %p15 = scmp.ge.s32.totalorder %s14, 4
      %s21 = sphi 0, %s33
      %s22 = sphi 0, %s29
      %s23 = sphi 0, %s21
      %s24 = sphi 0, %s22
      %s25 = sphi 0, %s23
      %s26 = sphi 0, %s24
      %s36 = sphi 0, %s38
      %s39 = sphi 0, %s36
      %s40 = sphi 0, %s39
      %s56 = sphi 0, %s40
      %s60 = sphi 0, %s60
      %s62 = sphi 0, %s60
      %s63 = sphi 0, %s62
      %s77 = sphi 0, %s63
      %s81 = sphi 0, %s81
      %s83 = sphi 0, %s81
      %s84 = sphi 0, %s83
      %s98 = sphi 0, %s84
      %s102 = sphi 0, %s102
      %s104 = sphi 0, %s102
      %s105 = sphi 0, %s104
      %s119 = sphi 0, %s105
      %s125 = sphi 0, %s127
      %s128 = sphi 0, %s125
      %s129 = sphi 0, %s128
      %s145 = sphi 0, %s129
    $region4: #{tpu_custom_call.1} parent=1 // loop_header_branch
      %17 = sbr.rel (%p15) target = $region8
    $region5: #{tpu_custom_call.1} parent=1 // loop_body
      %s19 = ssub.s32 %s14, 1
      %s20 = ssub.s32 %s14, 2
      %s27 = sadd.s32 1, %s22
      %p28 = scmp.ge.s32.totalorder %s27, 1
      %s29 = scalar_select %p28, 0, %s27
      %s30 = sadd.s32 1, %s21
      %s31 = scalar_select %p28, %s30, %s21
      %p32 = scmp.ge.s32.totalorder %s31, 2
      %s33 = scalar_select %p32, 0, %s31
      %s34 = ssub.s32 %s21, %s33
      %p35 = scmp.eq.s32.totalorder %s34, 0
      %s37 = sadd.s32 %s36, 1
      %s38 = scalar_select %p35, %s36, %s37
      %p41 = pneg %p35
      %p42 = scmp.eq.s32.totalorder %s14, 1
      %p43 = por %p41, %p42
      %p44 = scmp.ne.s32.totalorder %s36, %s39
      %p45 = scmp.eq.s32.totalorder %s14, 0
      %p46 = por %p44, %p45
      %p47 = scmp.ne.s32.totalorder %s36, %s39
      %p48 = scmp.eq.s32.totalorder %s19, 1
      %p49 = por %p47, %p48
      %p50 = scmp.ne.s32.totalorder %s39, %s40
      %p51 = scmp.eq.s32.totalorder %s19, 0
      %p52 = por %p50, %p51
      %p53 = scmp.ne.s32.totalorder %s39, %s40
      %p54 = scmp.eq.s32.totalorder %s20, 1
      %p55 = por %p53, %p54
      %p57 = scmp.ne.s32.totalorder %s40, %s56
      %p58 = scmp.eq.s32.totalorder %s20, 0
      %p59 = por %p57, %p58
      %s61 = sadd.s32 %s60, 1
      %p64 = scmp.eq.s32.totalorder %s14, 1
      %p65 = scmp.ne.s32.totalorder %s60, %s62
      %p66 = scmp.eq.s32.totalorder %s14, 0
      %p67 = por %p65, %p66
      %p68 = scmp.ne.s32.totalorder %s60, %s62
      %p69 = scmp.eq.s32.totalorder %s19, 1
      %p70 = por %p68, %p69
      %p71 = scmp.ne.s32.totalorder %s62, %s63
      %p72 = scmp.eq.s32.totalorder %s19, 0
      %p73 = por %p71, %p72
      %p74 = scmp.ne.s32.totalorder %s62, %s63
      %p75 = scmp.eq.s32.totalorder %s20, 1
      %p76 = por %p74, %p75
      %p78 = scmp.ne.s32.totalorder %s63, %s77
      %p79 = scmp.eq.s32.totalorder %s20, 0
      %p80 = por %p78, %p79
      %s82 = sadd.s32 %s81, 1
      %p85 = scmp.eq.s32.totalorder %s14, 1
      %p86 = scmp.ne.s32.totalorder %s81, %s83
      %p87 = scmp.eq.s32.totalorder %s14, 0
      %p88 = por %p86, %p87
      %p89 = scmp.ne.s32.totalorder %s81, %s83
      %p90 = scmp.eq.s32.totalorder %s19, 1
      %p91 = por %p89, %p90
      %p92 = scmp.ne.s32.totalorder %s83, %s84
      %p93 = scmp.eq.s32.totalorder %s19, 0
      %p94 = por %p92, %p93
      %p95 = scmp.ne.s32.totalorder %s83, %s84
      %p96 = scmp.eq.s32.totalorder %s20, 1
      %p97 = por %p95, %p96
      %p99 = scmp.ne.s32.totalorder %s84, %s98
      %p100 = scmp.eq.s32.totalorder %s20, 0
      %p101 = por %p99, %p100
      %s103 = sadd.s32 %s102, 1
      %p106 = scmp.eq.s32.totalorder %s14, 1
      %p107 = scmp.ne.s32.totalorder %s102, %s104
      %p108 = scmp.eq.s32.totalorder %s14, 0
      %p109 = por %p107, %p108
      %p110 = scmp.ne.s32.totalorder %s102, %s104
      %p111 = scmp.eq.s32.totalorder %s19, 1
      %p112 = por %p110, %p111
      %p113 = scmp.ne.s32.totalorder %s104, %s105
      %p114 = scmp.eq.s32.totalorder %s19, 0
      %p115 = por %p113, %p114
      %p116 = scmp.ne.s32.totalorder %s104, %s105
      %p117 = scmp.eq.s32.totalorder %s20, 1
      %p118 = por %p116, %p117
      %p120 = scmp.ne.s32.totalorder %s105, %s119
      %p121 = scmp.eq.s32.totalorder %s20, 0
      %p122 = por %p120, %p121
      %s123 = ssub.s32 %s21, %s33
      %p124 = scmp.eq.s32.totalorder %s123, 0
      %s126 = sadd.s32 %s125, 1
      %s127 = scalar_select %p124, %s125, %s126
      %p130 = pneg %p124
      %p131 = scmp.eq.s32.totalorder %s14, 1
      %p132 = por %p130, %p131
      %p133 = scmp.ne.s32.totalorder %s125, %s128
      %p134 = scmp.eq.s32.totalorder %s14, 0
      %p135 = por %p133, %p134
      %p136 = scmp.ne.s32.totalorder %s125, %s128
      %p137 = scmp.eq.s32.totalorder %s19, 1
      %p138 = por %p136, %p137
      %p139 = scmp.ne.s32.totalorder %s128, %s129
      %p140 = scmp.eq.s32.totalorder %s19, 0
      %p141 = por %p139, %p140
      %p142 = scmp.ne.s32.totalorder %s128, %s129
      %p143 = scmp.eq.s32.totalorder %s20, 1
      %p144 = por %p142, %p143
      %p146 = scmp.ne.s32.totalorder %s129, %s145
      %p147 = scmp.eq.s32.totalorder %s20, 0
      %p148 = por %p146, %p147
      %p149 = scmp.le.s32.totalorder 1, %s14
      %p150 = scmp.lt.s32.totalorder %s14, 3
      %p151 = pnand %p149, %p150
      %p152 = pneg %p151
      // Predicated region
      $region9: #{tpu_custom_call.1} parent=5 // pred_check
        _
      $region10: #{tpu_custom_call.1} parent=5 // pred_check_branch
        %154 = sbr.rel (%p151) target = $region12
      $region11: #{tpu_custom_call.1} parent=5 // pred_region
        %s155 = ssub.s32 %s14, 1
        // Predicated region
        $region13: #{tpu_custom_call.1} parent=11 // pred_check
          %p156 = pneg %p73
        $region14: #{tpu_custom_call.1} parent=11 // pred_check_branch
          %158 = sbr.rel (%p156) target = $region16
        $region15: #{tpu_custom_call.1} parent=11 // pred_region
          _
        $region16: #{tpu_custom_call.1} parent=11 // pred_fallthru
          _
        // Predicated region
        $region17: #{tpu_custom_call.1} parent=11 // pred_check
          %p159 = pneg %p94
        $region18: #{tpu_custom_call.1} parent=11 // pred_check_branch
          %161 = sbr.rel (%p159) target = $region20
        $region19: #{tpu_custom_call.1} parent=11 // pred_region
          _
        $region20: #{tpu_custom_call.1} parent=11 // pred_fallthru
          _
        // Predicated region
        $region21: #{tpu_custom_call.1} parent=11 // pred_check
          %p162 = pneg %p115
        $region22: #{tpu_custom_call.1} parent=11 // pred_check_branch
          %164 = sbr.rel (%p162) target = $region24
        $region23: #{tpu_custom_call.1} parent=11 // pred_region
          _
        $region24: #{tpu_custom_call.1} parent=11 // pred_fallthru
          _
      $region12: #{tpu_custom_call.1} parent=5 // pred_fallthru
        _
      %p165 = scmp.lt.s32.totalorder %s14, 2
      // Predicated region
      $region25: #{tpu_custom_call.1} parent=5 // pred_check
        %p166 = pneg %p165
      $region26: #{tpu_custom_call.1} parent=5 // pred_check_branch
        %168 = sbr.rel (%p166) target = $region28
      $region27: #{tpu_custom_call.1} parent=5 // pred_region
        // Predicated region
        $region29: #{tpu_custom_call.1} parent=27 // pred_check
          %p169 = pneg %p46
        $region30: #{tpu_custom_call.1} parent=27 // pred_check_branch
          %171 = sbr.rel (%p169) target = $region32
        $region31: #{tpu_custom_call.1} parent=27 // pred_region
          %p172 = scmp.lt.s32.totalorder %s21, 1
          %s173 = scalar_select %p172, %s21, 1
          %s174 = smul.addr %s173, 4
          %s175 = smul.addr %s174, 8
          %s176 = scalar_lea.vmem %s0, %s175
        $region32: #{tpu_custom_call.1} parent=27 // pred_fallthru
          _
      $region28: #{tpu_custom_call.1} parent=5 // pred_fallthru
        _
      %p177 = scmp.le.s32.totalorder 1, %s14
      %p178 = scmp.lt.s32.totalorder %s14, 3
      %p179 = pnand %p177, %p178
      %p180 = pneg %p179
      // Predicated region
      $region33: #{tpu_custom_call.1} parent=5 // pred_check
        _
      $region34: #{tpu_custom_call.1} parent=5 // pred_check_branch
        %182 = sbr.rel (%p179) target = $region36
      $region35: #{tpu_custom_call.1} parent=5 // pred_region
        %s183 = ssub.s32 %s14, 1
        %p184 = scmp.lt.s32.totalorder %s23, 1
        %s185 = scalar_select %p184, %s23, 1
        %s186 = smul.addr %s185, 4
        %s187 = smul.addr %s186, 8
        %s188 = scalar_lea.vmem %s0, %s187
        %p189 = pneg %p52
        %p190 = pneg %p49
        %p191 = pneg %p73
        %p192 = pneg %p70
        %p193 = pneg %p94
        %p194 = pneg %p91
        %p195 = pneg %p115
        %p196 = pneg %p112
        %p197 = pneg %p141
        %p198 = pneg %p138
        %s199 = sand.u32 %s128, 1
        %s200 = scalar_lea.sflag [#allocation4], %s199
        %s201 = sand.u32 %s128, 1
        %s202 = smul.addr %s201, 16
        %s203 = scalar_lea.vmem [#allocation3], %s202
        %p204 = scmp.lt.s32.totalorder %s23, 1
        %s205 = scalar_select %p204, %s23, 1
        %s206 = smul.addr %s205, 4
        %s207 = smul.addr %s206, 8
        %s208 = scalar_lea.vmem %s0, %s207
        %p209 = scmp.eq.s32.totalorder %s24, 0
        // Predicated region
        $region37: #{tpu_custom_call.1} parent=35 // pred_check
          %p210 = pneg %p209
        $region38: #{tpu_custom_call.1} parent=35 // pred_check_branch
          %212 = sbr.rel (%p210) target = $region40
        $region39: #{tpu_custom_call.1} parent=35 // pred_region
          %213 = vst [vmem:[%s203] sm:$0xff] 0.0
          %214 = vst [vmem:[%s203 + $0x8] sm:$0xff] 0.0
        $region40: #{tpu_custom_call.1} parent=35 // pred_fallthru
          _
        %s215 = smul.u32 %s24, 256
        %s216 = sshra.s32 %s215, 7
        %s217 = sand.u32 %s215, 127
        %s218 = smul.addr %s216, 8
        %s219 = scalar_lea.vmem %s208, %s218
        %v220 = vld [vmem:[%s219] sm:$0xff]
        %v221 = vld [vmem:[%s219 + $0x8] sm:$0xff]
        %v222 = vld [vmem:[%s219 + $0x10] sm:$0x1]
        %v223 = vld [vmem:[%s219 + $0x18] sm:$0x1]
        %v224 = vld [vmem:[%s1] sm:$0xff]
        %v225 = vld [vmem:[%s1 + $0x8] sm:$0x1]
        %226 = vxpose.xlu0.b32.start [1/16] %v220, 128
        %227 = vxpose.xlu0.b32.cont [2/16] %v222, 128
        %228 = vxpose.xlu0.b32.cont [3/16] 0.0, 128
        %229 = vxpose.xlu0.b32.cont [4/16] 0.0, 128
        %230 = vxpose.xlu0.b32.cont [5/16] 0.0, 128
        %231 = vxpose.xlu0.b32.cont [6/16] 0.0, 128
        %232 = vxpose.xlu0.b32.cont [7/16] 0.0, 128
        %233 = vxpose.xlu0.b32.cont [8/16] 0.0, 128
        %234 = vxpose.xlu0.b32.cont [9/16] 0.0, 128
        %235 = vxpose.xlu0.b32.cont [10/16] 0.0, 128
        %236 = vxpose.xlu0.b32.cont [11/16] 0.0, 128
        %237 = vxpose.xlu0.b32.cont [12/16] 0.0, 128
        %238 = vxpose.xlu0.b32.cont [13/16] 0.0, 128
        %239 = vxpose.xlu0.b32.cont [14/16] 0.0, 128
        %240 = vxpose.xlu0.b32.cont [15/16] 0.0, 128
        %241 = vxpose.xlu0.b32.end [16/16] 0.0, 128
        %v242 = vpop.trf.xlu0
        %v243 = vpop.trf.xlu0
        %v244 = vpop.trf.xlu0
        %v245 = vpop.trf.xlu0
        %v246 = vpop.trf.xlu0
        %v247 = vpop.trf.xlu0
        %v248 = vpop.trf.xlu0
        %v249 = vpop.trf.xlu0
        %v250 = vpop.trf.xlu0
        %v251 = vpop.trf.xlu0
        %v252 = vpop.trf.xlu0
        %v253 = vpop.trf.xlu0
        %v254 = vpop.trf.xlu0
        %v255 = vpop.trf.xlu0
        %v256 = vpop.trf.xlu0
        %v257 = vpop.trf.xlu0
        %258 = vxpose.xlu0.b32.start [1/16] %v221, 128
        %259 = vxpose.xlu0.b32.cont [2/16] %v223, 128
        %260 = vxpose.xlu0.b32.cont [3/16] 0.0, 128
        %261 = vxpose.xlu0.b32.cont [4/16] 0.0, 128
        %262 = vxpose.xlu0.b32.cont [5/16] 0.0, 128
        %263 = vxpose.xlu0.b32.cont [6/16] 0.0, 128
        %264 = vxpose.xlu0.b32.cont [7/16] 0.0, 128
        %265 = vxpose.xlu0.b32.cont [8/16] 0.0, 128
        %266 = vxpose.xlu0.b32.cont [9/16] 0.0, 128
        %267 = vxpose.xlu0.b32.cont [10/16] 0.0, 128
        %268 = vxpose.xlu0.b32.cont [11/16] 0.0, 128
        %269 = vxpose.xlu0.b32.cont [12/16] 0.0, 128
        %270 = vxpose.xlu0.b32.cont [13/16] 0.0, 128
        %271 = vxpose.xlu0.b32.cont [14/16] 0.0, 128
        %272 = vxpose.xlu0.b32.cont [15/16] 0.0, 128
        %273 = vxpose.xlu0.b32.end [16/16] 0.0, 128
        %v274 = vpop.trf.xlu0
        %v275 = vpop.trf.xlu0
        %v276 = vpop.trf.xlu0
        %v277 = vpop.trf.xlu0
        %v278 = vpop.trf.xlu0
        %v279 = vpop.trf.xlu0
        %v280 = vpop.trf.xlu0
        %v281 = vpop.trf.xlu0
        %v282 = vpop.trf.xlu0
        %v283 = vpop.trf.xlu0
        %v284 = vpop.trf.xlu0
        %v285 = vpop.trf.xlu0
        %v286 = vpop.trf.xlu0
        %v287 = vpop.trf.xlu0
        %v288 = vpop.trf.xlu0
        %v289 = vpop.trf.xlu0
        %vm290 = vcmask 72704
        %v292 = vsel %vm290, %v242, 0
        %v295 = vsel %vm290, %v243, 0
        %v298 = vsel %vm290, %v244, 0
        %v301 = vsel %vm290, %v245, 0
        %v304 = vsel %vm290, %v246, 0
        %v307 = vsel %vm290, %v247, 0
        %v310 = vsel %vm290, %v248, 0
        %v313 = vsel %vm290, %v249, 0
        %v316 = vsel %vm290, %v250, 0
        %v319 = vsel %vm290, %v251, 0
        %v322 = vsel %vm290, %v252, 0
        %v325 = vsel %vm290, %v253, 0
        %v328 = vsel %vm290, %v254, 0
        %v331 = vsel %vm290, %v255, 0
        %v334 = vsel %vm290, %v256, 0
        %v337 = vsel %vm290, %v257, 0
        %v340 = vsel %vm290, %v274, 0
        %v343 = vsel %vm290, %v275, 0
        %v346 = vsel %vm290, %v276, 0
        %v349 = vsel %vm290, %v277, 0
        %v352 = vsel %vm290, %v278, 0
        %v355 = vsel %vm290, %v279, 0
        %v358 = vsel %vm290, %v280, 0
        %v361 = vsel %vm290, %v281, 0
        %v364 = vsel %vm290, %v282, 0
        %v367 = vsel %vm290, %v283, 0
        %v370 = vsel %vm290, %v284, 0
        %v373 = vsel %vm290, %v285, 0
        %v376 = vsel %vm290, %v286, 0
        %v379 = vsel %vm290, %v287, 0
        %v382 = vsel %vm290, %v288, 0
        %v385 = vsel %vm290, %v289, 0
        %v388 = vsel %vm290, %v224, 0
        %v391 = vsel %vm290, %v225, 0
        %393 = vmatprep.subr.mxu0 0.0
        %394 = vmatpush1.xpose.msra.mxu0 %v388
        %395 = vmatprep.subr.mxu0 0.0
        %396 = vmatpush1.xpose.msra.mxu0 %v391
        %397 = vmatprep.subr.mxu0 0.0
        %398 = vmatpush1.xpose.msra.mxu0 0.0
        %399 = vmatprep.subr.mxu0 0.0
        %400 = vmatpush1.xpose.msra.mxu0 0.0
        %401 = vmatprep.subr.mxu0 0.0
        %402 = vmatpush1.xpose.msra.mxu0 0.0
        %403 = vmatprep.subr.mxu0 0.0
        %404 = vmatpush1.xpose.msra.mxu0 0.0
        %405 = vmatprep.subr.mxu0 0.0
        %406 = vmatpush1.xpose.msra.mxu0 0.0
        %407 = vmatprep.subr.mxu0 0.0
        %408 = vmatpush1.xpose.msra.mxu0 0.0
        %409 = vmatprep.subr.mxu0 0.0
        %410 = vmatpush1.xpose.msra.mxu0 0.0
        %411 = vmatprep.subr.mxu0 0.0
        %412 = vmatpush1.xpose.msra.mxu0 0.0
        %413 = vmatprep.subr.mxu0 0.0
        %414 = vmatpush1.xpose.msra.mxu0 0.0
        %415 = vmatprep.subr.mxu0 0.0
        %416 = vmatpush1.xpose.msra.mxu0 0.0
        %417 = vmatprep.subr.mxu0 0.0
        %418 = vmatpush1.xpose.msra.mxu0 0.0
        %419 = vmatprep.subr.mxu0 0.0
        %420 = vmatpush1.xpose.msra.mxu0 0.0
        %421 = vmatprep.subr.mxu0 0.0
        %422 = vmatpush1.xpose.msra.mxu0 0.0
        %423 = vmatprep.subr.mxu0 0.0
        %424 = vmatpush1.xpose.msra.mxu0 0.0
        %425 = vmatprep.subr.mxu0 0.0
        %426 = vmatpush1.xpose.msra.mxu0 0.0
        %427 = vmatprep.subr.mxu0 0.0
        %428 = vmatpush1.xpose.msra.mxu0 0.0
        %429 = vmatprep.subr.mxu0 0.0
        %430 = vmatpush1.xpose.msra.mxu0 0.0
        %431 = vmatprep.subr.mxu0 0.0
        %432 = vmatpush1.xpose.msra.mxu0 0.0
        %433 = vmatprep.subr.mxu0 0.0
        %434 = vmatpush1.xpose.msra.mxu0 0.0
        %435 = vmatprep.subr.mxu0 0.0
        %436 = vmatpush1.xpose.msra.mxu0 0.0
        %437 = vmatprep.subr.mxu0 0.0
        %438 = vmatpush1.xpose.msra.mxu0 0.0
        %439 = vmatprep.subr.mxu0 0.0
        %440 = vmatpush1.xpose.msra.mxu0 0.0
        %441 = vmatprep.subr.mxu0 0.0
        %442 = vmatpush1.xpose.msra.mxu0 0.0
        %443 = vmatprep.subr.mxu0 0.0
        %444 = vmatpush1.xpose.msra.mxu0 0.0
        %445 = vmatprep.subr.mxu0 0.0
        %446 = vmatpush1.xpose.msra.mxu0 0.0
        %447 = vmatprep.subr.mxu0 0.0
        %448 = vmatpush1.xpose.msra.mxu0 0.0
        %449 = vmatprep.subr.mxu0 0.0
        %450 = vmatpush1.xpose.msra.mxu0 0.0
        %451 = vmatprep.subr.mxu0 0.0
        %452 = vmatpush1.xpose.msra.mxu0 0.0
        %453 = vmatprep.subr.mxu0 0.0
        %454 = vmatpush1.xpose.msra.mxu0 0.0
        %455 = vmatprep.subr.mxu0 0.0
        %456 = vmatpush1.xpose.msra.mxu0 0.0
        %457 = vmatprep.mubr.f32.mxu0 0.0
        %458 = vmatmul.mubr.f32.gmra.mrb[0].mxu0 %v292
        %v459 = vpop.f32.mrb[0].mxu0
        %v460 = vadd.f32 0.0, %v459
        %v461 = vpop.f32.mrb[0].mxu0
        %462 = vmatprep.mubr.f32.mxu0 0.0
        %463 = vmatmul.mubr.f32.gmra.mrb[0].mxu0 %v295
        %v464 = vpop.f32.mrb[0].mxu0
        %v465 = vadd.f32 0.0, %v464
        %v466 = vpop.f32.mrb[0].mxu0
        %467 = vmatprep.mubr.f32.mxu0 0.0
        %468 = vmatmul.mubr.f32.gmra.mrb[0].mxu0 %v298
        %v469 = vpop.f32.mrb[0].mxu0
        %v470 = vadd.f32 0.0, %v469
        %v471 = vpop.f32.mrb[0].mxu0
        %472 = vmatprep.mubr.f32.mxu0 0.0
        %473 = vmatmul.mubr.f32.gmra.mrb[0].mxu0 %v301
        %v474 = vpop.f32.mrb[0].mxu0
        %v475 = vadd.f32 0.0, %v474
        %v476 = vpop.f32.mrb[0].mxu0
        %477 = vmatprep.mubr.f32.mxu0 0.0
        %478 = vmatmul.mubr.f32.gmra.mrb[0].mxu0 %v304
        %v479 = vpop.f32.mrb[0].mxu0
        %v480 = vadd.f32 0.0, %v479
        %v481 = vpop.f32.mrb[0].mxu0
        %482 = vmatprep.mubr.f32.mxu0 0.0
        %483 = vmatmul.mubr.f32.gmra.mrb[0].mxu0 %v307
        %v484 = vpop.f32.mrb[0].mxu0
        %v485 = vadd.f32 0.0, %v484
        %v486 = vpop.f32.mrb[0].mxu0
        %487 = vmatprep.mubr.f32.mxu0 0.0
        %488 = vmatmul.mubr.f32.gmra.mrb[0].mxu0 %v310
        %v489 = vpop.f32.mrb[0].mxu0
        %v490 = vadd.f32 0.0, %v489
        %v491 = vpop.f32.mrb[0].mxu0
        %492 = vmatprep.mubr.f32.mxu0 0.0
        %493 = vmatmul.mubr.f32.gmra.mrb[0].mxu0 %v313
        %v494 = vpop.f32.mrb[0].mxu0
        %v495 = vadd.f32 0.0, %v494
        %v496 = vpop.f32.mrb[0].mxu0
        %497 = vmatprep.mubr.f32.mxu0 0.0
        %498 = vmatmul.mubr.f32.gmra.mrb[0].mxu0 %v316
        %v499 = vpop.f32.mrb[0].mxu0
        %v500 = vadd.f32 0.0, %v499
        %v501 = vpop.f32.mrb[0].mxu0
        %502 = vmatprep.mubr.f32.mxu0 0.0
        %503 = vmatmul.mubr.f32.gmra.mrb[0].mxu0 %v319
        %v504 = vpop.f32.mrb[0].mxu0
        %v505 = vadd.f32 0.0, %v504
        %v506 = vpop.f32.mrb[0].mxu0
        %507 = vmatprep.mubr.f32.mxu0 0.0
        %508 = vmatmul.mubr.f32.gmra.mrb[0].mxu0 %v322
        %v509 = vpop.f32.mrb[0].mxu0
        %v510 = vadd.f32 0.0, %v509
        %v511 = vpop.f32.mrb[0].mxu0
        %512 = vmatprep.mubr.f32.mxu0 0.0
        %513 = vmatmul.mubr.f32.gmra.mrb[0].mxu0 %v325
        %v514 = vpop.f32.mrb[0].mxu0
        %v515 = vadd.f32 0.0, %v514
        %v516 = vpop.f32.mrb[0].mxu0
        %517 = vmatprep.mubr.f32.mxu0 0.0
        %518 = vmatmul.mubr.f32.gmra.mrb[0].mxu0 %v328
        %v519 = vpop.f32.mrb[0].mxu0
        %v520 = vadd.f32 0.0, %v519
        %v521 = vpop.f32.mrb[0].mxu0
        %522 = vmatprep.mubr.f32.mxu0 0.0
        %523 = vmatmul.mubr.f32.gmra.mrb[0].mxu0 %v331
        %v524 = vpop.f32.mrb[0].mxu0
        %v525 = vadd.f32 0.0, %v524
        %v526 = vpop.f32.mrb[0].mxu0
        %527 = vmatprep.mubr.f32.mxu0 0.0
        %528 = vmatmul.mubr.f32.gmra.mrb[0].mxu0 %v334
        %v529 = vpop.f32.mrb[0].mxu0
        %v530 = vadd.f32 0.0, %v529
        %v531 = vpop.f32.mrb[0].mxu0
        %532 = vmatprep.mubr.f32.mxu0 0.0
        %533 = vmatmul.mubr.f32.gmra.mrb[0].mxu0 %v337
        %v534 = vpop.f32.mrb[0].mxu0
        %v535 = vadd.f32 0.0, %v534
        %v536 = vpop.f32.mrb[0].mxu0
        %537 = vmatprep.mubr.f32.mxu0 0.0
        %538 = vmatmul.mubr.f32.gmra.mrb[0].mxu0 %v340
        %v539 = vpop.f32.mrb[0].mxu0
        %v540 = vadd.f32 0.0, %v539
        %v541 = vpop.f32.mrb[0].mxu0
        %542 = vmatprep.mubr.f32.mxu0 0.0
        %543 = vmatmul.mubr.f32.gmra.mrb[0].mxu0 %v343
        %v544 = vpop.f32.mrb[0].mxu0
        %v545 = vadd.f32 0.0, %v544
        %v546 = vpop.f32.mrb[0].mxu0
        %547 = vmatprep.mubr.f32.mxu0 0.0
        %548 = vmatmul.mubr.f32.gmra.mrb[0].mxu0 %v346
        %v549 = vpop.f32.mrb[0].mxu0
        %v550 = vadd.f32 0.0, %v549
        %v551 = vpop.f32.mrb[0].mxu0
        %552 = vmatprep.mubr.f32.mxu0 0.0
        %553 = vmatmul.mubr.f32.gmra.mrb[0].mxu0 %v349
        %v554 = vpop.f32.mrb[0].mxu0
        %v555 = vadd.f32 0.0, %v554
        %v556 = vpop.f32.mrb[0].mxu0
        %557 = vmatprep.mubr.f32.mxu0 0.0
        %558 = vmatmul.mubr.f32.gmra.mrb[0].mxu0 %v352
        %v559 = vpop.f32.mrb[0].mxu0
        %v560 = vadd.f32 0.0, %v559
        %v561 = vpop.f32.mrb[0].mxu0
        %562 = vmatprep.mubr.f32.mxu0 0.0
        %563 = vmatmul.mubr.f32.gmra.mrb[0].mxu0 %v355
        %v564 = vpop.f32.mrb[0].mxu0
        %v565 = vadd.f32 0.0, %v564
        %v566 = vpop.f32.mrb[0].mxu0
        %567 = vmatprep.mubr.f32.mxu0 0.0
        %568 = vmatmul.mubr.f32.gmra.mrb[0].mxu0 %v358
        %v569 = vpop.f32.mrb[0].mxu0
        %v570 = vadd.f32 0.0, %v569
        %v571 = vpop.f32.mrb[0].mxu0
        %572 = vmatprep.mubr.f32.mxu0 0.0
        %573 = vmatmul.mubr.f32.gmra.mrb[0].mxu0 %v361
        %v574 = vpop.f32.mrb[0].mxu0
        %v575 = vadd.f32 0.0, %v574
        %v576 = vpop.f32.mrb[0].mxu0
        %577 = vmatprep.mubr.f32.mxu0 0.0
        %578 = vmatmul.mubr.f32.gmra.mrb[0].mxu0 %v364
        %v579 = vpop.f32.mrb[0].mxu0
        %v580 = vadd.f32 0.0, %v579
        %v581 = vpop.f32.mrb[0].mxu0
        %582 = vmatprep.mubr.f32.mxu0 0.0
        %583 = vmatmul.mubr.f32.gmra.mrb[0].mxu0 %v367
        %v584 = vpop.f32.mrb[0].mxu0
        %v585 = vadd.f32 0.0, %v584
        %v586 = vpop.f32.mrb[0].mxu0
        %587 = vmatprep.mubr.f32.mxu0 0.0
        %588 = vmatmul.mubr.f32.gmra.mrb[0].mxu0 %v370
        %v589 = vpop.f32.mrb[0].mxu0
        %v590 = vadd.f32 0.0, %v589
        %v591 = vpop.f32.mrb[0].mxu0
        %592 = vmatprep.mubr.f32.mxu0 0.0
        %593 = vmatmul.mubr.f32.gmra.mrb[0].mxu0 %v373
        %v594 = vpop.f32.mrb[0].mxu0
        %v595 = vadd.f32 0.0, %v594
        %v596 = vpop.f32.mrb[0].mxu0
        %597 = vmatprep.mubr.f32.mxu0 0.0
        %598 = vmatmul.mubr.f32.gmra.mrb[0].mxu0 %v376
        %v599 = vpop.f32.mrb[0].mxu0
        %v600 = vadd.f32 0.0, %v599
        %v601 = vpop.f32.mrb[0].mxu0
        %602 = vmatprep.mubr.f32.mxu0 0.0
        %603 = vmatmul.mubr.f32.gmra.mrb[0].mxu0 %v379
        %v604 = vpop.f32.mrb[0].mxu0
        %v605 = vadd.f32 0.0, %v604
        %v606 = vpop.f32.mrb[0].mxu0
        %607 = vmatprep.mubr.f32.mxu0 0.0
        %608 = vmatmul.mubr.f32.gmra.mrb[0].mxu0 %v382
        %v609 = vpop.f32.mrb[0].mxu0
        %v610 = vadd.f32 0.0, %v609
        %v611 = vpop.f32.mrb[0].mxu0
        %612 = vmatprep.mubr.f32.mxu0 0.0
        %613 = vmatmul.mubr.f32.gmra.mrb[0].mxu0 %v385
        %v614 = vpop.f32.mrb[0].mxu0
        %v615 = vadd.f32 0.0, %v614
        %v616 = vpop.f32.mrb[0].mxu0
        %617 = vdwg.mxu0
        %v618 = vld [vmem:[%s2] sm:$0xff]
        %v620 = vsel %vm290, %v618, 0
        %622 = vmatprep.subr.mxu0 0.0
        %623 = vmatpush1.xpose.msra.mxu0 %v620
        %624 = vmatprep.subr.mxu0 0.0
        %625 = vmatpush1.xpose.msra.mxu0 0.0
        %626 = vmatprep.subr.mxu0 0.0
        %627 = vmatpush1.xpose.msra.mxu0 0.0
        %628 = vmatprep.subr.mxu0 0.0
        %629 = vmatpush1.xpose.msra.mxu0 0.0
        %630 = vmatprep.subr.mxu0 0.0
        %631 = vmatpush1.xpose.msra.mxu0 0.0
        %632 = vmatprep.subr.mxu0 0.0
        %633 = vmatpush1.xpose.msra.mxu0 0.0
        %634 = vmatprep.subr.mxu0 0.0
        %635 = vmatpush1.xpose.msra.mxu0 0.0
        %636 = vmatprep.subr.mxu0 0.0
        %637 = vmatpush1.xpose.msra.mxu0 0.0
        %638 = vmatprep.subr.mxu0 0.0
        %639 = vmatpush1.xpose.msra.mxu0 0.0
        %640 = vmatprep.subr.mxu0 0.0
        %641 = vmatpush1.xpose.msra.mxu0 0.0
        %642 = vmatprep.subr.mxu0 0.0
        %643 = vmatpush1.xpose.msra.mxu0 0.0
        %644 = vmatprep.subr.mxu0 0.0
        %645 = vmatpush1.xpose.msra.mxu0 0.0
        %646 = vmatprep.subr.mxu0 0.0
        %647 = vmatpush1.xpose.msra.mxu0 0.0
        %648 = vmatprep.subr.mxu0 0.0
        %649 = vmatpush1.xpose.msra.mxu0 0.0
        %650 = vmatprep.subr.mxu0 0.0
        %651 = vmatpush1.xpose.msra.mxu0 0.0
        %652 = vmatprep.subr.mxu0 0.0
        %653 = vmatpush1.xpose.msra.mxu0 0.0
        %654 = vmatprep.subr.mxu0 0.0
        %655 = vmatpush1.xpose.msra.mxu0 0.0
        %656 = vmatprep.subr.mxu0 0.0
        %657 = vmatpush1.xpose.msra.mxu0 0.0
        %658 = vmatprep.subr.mxu0 0.0
        %659 = vmatpush1.xpose.msra.mxu0 0.0
        %660 = vmatprep.subr.mxu0 0.0
        %661 = vmatpush1.xpose.msra.mxu0 0.0
        %662 = vmatprep.subr.mxu0 0.0
        %663 = vmatpush1.xpose.msra.mxu0 0.0
        %664 = vmatprep.subr.mxu0 0.0
        %665 = vmatpush1.xpose.msra.mxu0 0.0
        %666 = vmatprep.subr.mxu0 0.0
        %667 = vmatpush1.xpose.msra.mxu0 0.0
        %668 = vmatprep.subr.mxu0 0.0
        %669 = vmatpush1.xpose.msra.mxu0 0.0
        %670 = vmatprep.subr.mxu0 0.0
        %671 = vmatpush1.xpose.msra.mxu0 0.0
        %672 = vmatprep.subr.mxu0 0.0
        %673 = vmatpush1.xpose.msra.mxu0 0.0
        %674 = vmatprep.subr.mxu0 0.0
        %675 = vmatpush1.xpose.msra.mxu0 0.0
        %676 = vmatprep.subr.mxu0 0.0
        %677 = vmatpush1.xpose.msra.mxu0 0.0
        %678 = vmatprep.subr.mxu0 0.0
        %679 = vmatpush1.xpose.msra.mxu0 0.0
        %680 = vmatprep.subr.mxu0 0.0
        %681 = vmatpush1.xpose.msra.mxu0 0.0
        %682 = vmatprep.subr.mxu0 0.0
        %683 = vmatpush1.xpose.msra.mxu0 0.0
        %684 = vmatprep.subr.mxu0 0.0
        %685 = vmatpush1.xpose.msra.mxu0 0.0
        %686 = vmatprep.mubr.f32.mxu0 0.0
        %687 = vmatmul.mubr.f32.gmra.mrb[0].mxu0 %v292
        %v688 = vpop.f32.mrb[0].mxu0
        %v689 = vadd.f32 0.0, %v688
        %v690 = vpop.f32.mrb[0].mxu0
        %691 = vmatprep.mubr.f32.mxu0 0.0
        %692 = vmatmul.mubr.f32.gmra.mrb[0].mxu0 %v295
        %v693 = vpop.f32.mrb[0].mxu0
        %v694 = vadd.f32 0.0, %v693
        %v695 = vpop.f32.mrb[0].mxu0
        %696 = vmatprep.mubr.f32.mxu0 0.0
        %697 = vmatmul.mubr.f32.gmra.mrb[0].mxu0 %v298
        %v698 = vpop.f32.mrb[0].mxu0
        %v699 = vadd.f32 0.0, %v698
        %v700 = vpop.f32.mrb[0].mxu0
        %701 = vmatprep.mubr.f32.mxu0 0.0
        %702 = vmatmul.mubr.f32.gmra.mrb[0].mxu0 %v301
        %v703 = vpop.f32.mrb[0].mxu0
        %v704 = vadd.f32 0.0, %v703
        %v705 = vpop.f32.mrb[0].mxu0
        %706 = vmatprep.mubr.f32.mxu0 0.0
        %707 = vmatmul.mubr.f32.gmra.mrb[0].mxu0 %v304
        %v708 = vpop.f32.mrb[0].mxu0
        %v709 = vadd.f32 0.0, %v708
        %v710 = vpop.f32.mrb[0].mxu0
        %711 = vmatprep.mubr.f32.mxu0 0.0
        %712 = vmatmul.mubr.f32.gmra.mrb[0].mxu0 %v307
        %v713 = vpop.f32.mrb[0].mxu0
        %v714 = vadd.f32 0.0, %v713
        %v715 = vpop.f32.mrb[0].mxu0
        %716 = vmatprep.mubr.f32.mxu0 0.0
        %717 = vmatmul.mubr.f32.gmra.mrb[0].mxu0 %v310
        %v718 = vpop.f32.mrb[0].mxu0
        %v719 = vadd.f32 0.0, %v718
        %v720 = vpop.f32.mrb[0].mxu0
        %721 = vmatprep.mubr.f32.mxu0 0.0
        %722 = vmatmul.mubr.f32.gmra.mrb[0].mxu0 %v313
        %v723 = vpop.f32.mrb[0].mxu0
        %v724 = vadd.f32 0.0, %v723
        %v725 = vpop.f32.mrb[0].mxu0
        %726 = vmatprep.mubr.f32.mxu0 0.0
        %727 = vmatmul.mubr.f32.gmra.mrb[0].mxu0 %v316
        %v728 = vpop.f32.mrb[0].mxu0
        %v729 = vadd.f32 0.0, %v728
        %v730 = vpop.f32.mrb[0].mxu0
        %731 = vmatprep.mubr.f32.mxu0 0.0
        %732 = vmatmul.mubr.f32.gmra.mrb[0].mxu0 %v319
        %v733 = vpop.f32.mrb[0].mxu0
        %v734 = vadd.f32 0.0, %v733
        %v735 = vpop.f32.mrb[0].mxu0
        %736 = vmatprep.mubr.f32.mxu0 0.0
        %737 = vmatmul.mubr.f32.gmra.mrb[0].mxu0 %v322
        %v738 = vpop.f32.mrb[0].mxu0
        %v739 = vadd.f32 0.0, %v738
        %v740 = vpop.f32.mrb[0].mxu0
        %741 = vmatprep.mubr.f32.mxu0 0.0
        %742 = vmatmul.mubr.f32.gmra.mrb[0].mxu0 %v325
        %v743 = vpop.f32.mrb[0].mxu0
        %v744 = vadd.f32 0.0, %v743
        %v745 = vpop.f32.mrb[0].mxu0
        %746 = vmatprep.mubr.f32.mxu0 0.0
        %747 = vmatmul.mubr.f32.gmra.mrb[0].mxu0 %v328
        %v748 = vpop.f32.mrb[0].mxu0
        %v749 = vadd.f32 0.0, %v748
        %v750 = vpop.f32.mrb[0].mxu0
        %751 = vmatprep.mubr.f32.mxu0 0.0
        %752 = vmatmul.mubr.f32.gmra.mrb[0].mxu0 %v331
        %v753 = vpop.f32.mrb[0].mxu0
        %v754 = vadd.f32 0.0, %v753
        %v755 = vpop.f32.mrb[0].mxu0
        %756 = vmatprep.mubr.f32.mxu0 0.0
        %757 = vmatmul.mubr.f32.gmra.mrb[0].mxu0 %v334
        %v758 = vpop.f32.mrb[0].mxu0
        %v759 = vadd.f32 0.0, %v758
        %v760 = vpop.f32.mrb[0].mxu0
        %761 = vmatprep.mubr.f32.mxu0 0.0
        %762 = vmatmul.mubr.f32.gmra.mrb[0].mxu0 %v337
        %v763 = vpop.f32.mrb[0].mxu0
        %v764 = vadd.f32 0.0, %v763
        %v765 = vpop.f32.mrb[0].mxu0
        %766 = vmatprep.mubr.f32.mxu0 0.0
        %767 = vmatmul.mubr.f32.gmra.mrb[0].mxu0 %v340
        %v768 = vpop.f32.mrb[0].mxu0
        %v769 = vadd.f32 0.0, %v768
        %v770 = vpop.f32.mrb[0].mxu0
        %771 = vmatprep.mubr.f32.mxu0 0.0
        %772 = vmatmul.mubr.f32.gmra.mrb[0].mxu0 %v343
        %v773 = vpop.f32.mrb[0].mxu0
        %v774 = vadd.f32 0.0, %v773
        %v775 = vpop.f32.mrb[0].mxu0
        %776 = vmatprep.mubr.f32.mxu0 0.0
        %777 = vmatmul.mubr.f32.gmra.mrb[0].mxu0 %v346
        %v778 = vpop.f32.mrb[0].mxu0
        %v779 = vadd.f32 0.0, %v778
        %v780 = vpop.f32.mrb[0].mxu0
        %781 = vmatprep.mubr.f32.mxu0 0.0
        %782 = vmatmul.mubr.f32.gmra.mrb[0].mxu0 %v349
        %v783 = vpop.f32.mrb[0].mxu0
        %v784 = vadd.f32 0.0, %v783
        %v785 = vpop.f32.mrb[0].mxu0
        %786 = vmatprep.mubr.f32.mxu0 0.0
        %787 = vmatmul.mubr.f32.gmra.mrb[0].mxu0 %v352
        %v788 = vpop.f32.mrb[0].mxu0
        %v789 = vadd.f32 0.0, %v788
        %v790 = vpop.f32.mrb[0].mxu0
        %791 = vmatprep.mubr.f32.mxu0 0.0
        %792 = vmatmul.mubr.f32.gmra.mrb[0].mxu0 %v355
        %v793 = vpop.f32.mrb[0].mxu0
        %v794 = vadd.f32 0.0, %v793
        %v795 = vpop.f32.mrb[0].mxu0
        %796 = vmatprep.mubr.f32.mxu0 0.0
        %797 = vmatmul.mubr.f32.gmra.mrb[0].mxu0 %v358
        %v798 = vpop.f32.mrb[0].mxu0
        %v799 = vadd.f32 0.0, %v798
        %v800 = vpop.f32.mrb[0].mxu0
        %801 = vmatprep.mubr.f32.mxu0 0.0
        %802 = vmatmul.mubr.f32.gmra.mrb[0].mxu0 %v361
        %v803 = vpop.f32.mrb[0].mxu0
        %v804 = vadd.f32 0.0, %v803
        %v805 = vpop.f32.mrb[0].mxu0
        %806 = vmatprep.mubr.f32.mxu0 0.0
        %807 = vmatmul.mubr.f32.gmra.mrb[0].mxu0 %v364
        %v808 = vpop.f32.mrb[0].mxu0
        %v809 = vadd.f32 0.0, %v808
        %v810 = vpop.f32.mrb[0].mxu0
        %811 = vmatprep.mubr.f32.mxu0 0.0
        %812 = vmatmul.mubr.f32.gmra.mrb[0].mxu0 %v367
        %v813 = vpop.f32.mrb[0].mxu0
        %v814 = vadd.f32 0.0, %v813
        %v815 = vpop.f32.mrb[0].mxu0
        %816 = vmatprep.mubr.f32.mxu0 0.0
        %817 = vmatmul.mubr.f32.gmra.mrb[0].mxu0 %v370
        %v818 = vpop.f32.mrb[0].mxu0
        %v819 = vadd.f32 0.0, %v818
        %v820 = vpop.f32.mrb[0].mxu0
        %821 = vmatprep.mubr.f32.mxu0 0.0
        %822 = vmatmul.mubr.f32.gmra.mrb[0].mxu0 %v373
        %v823 = vpop.f32.mrb[0].mxu0
        %v824 = vadd.f32 0.0, %v823
        %v825 = vpop.f32.mrb[0].mxu0
        %826 = vmatprep.mubr.f32.mxu0 0.0
        %827 = vmatmul.mubr.f32.gmra.mrb[0].mxu0 %v376
        %v828 = vpop.f32.mrb[0].mxu0
        %v829 = vadd.f32 0.0, %v828
        %v830 = vpop.f32.mrb[0].mxu0
        %831 = vmatprep.mubr.f32.mxu0 0.0
        %832 = vmatmul.mubr.f32.gmra.mrb[0].mxu0 %v379
        %v833 = vpop.f32.mrb[0].mxu0
        %v834 = vadd.f32 0.0, %v833
        %v835 = vpop.f32.mrb[0].mxu0
        %836 = vmatprep.mubr.f32.mxu0 0.0
        %837 = vmatmul.mubr.f32.gmra.mrb[0].mxu0 %v382
        %v838 = vpop.f32.mrb[0].mxu0
        %v839 = vadd.f32 0.0, %v838
        %v840 = vpop.f32.mrb[0].mxu0
        %841 = vmatprep.mubr.f32.mxu0 0.0
        %842 = vmatmul.mubr.f32.gmra.mrb[0].mxu0 %v385
        %v843 = vpop.f32.mrb[0].mxu0
        %v844 = vadd.f32 0.0, %v843
        %v845 = vpop.f32.mrb[0].mxu0
        %846 = vdwg.mxu0
        %v847 = vld [vmem:[%s208] sm:$0xff]
        %v848 = vld [vmem:[%s208 + $0x8] sm:$0xff]
        %v849 = vld [vmem:[%s208 + $0x10] sm:$0x1]
        %v850 = vld [vmem:[%s208 + $0x18] sm:$0x1]
        %v852 = vsel %vm290, %v460, 0
        %v855 = vsel %vm290, %v465, 0
        %v858 = vsel %vm290, %v470, 0
        %v861 = vsel %vm290, %v475, 0
        %v864 = vsel %vm290, %v480, 0
        %v867 = vsel %vm290, %v485, 0
        %v870 = vsel %vm290, %v490, 0
        %v873 = vsel %vm290, %v495, 0
        %v876 = vsel %vm290, %v500, 0
        %v879 = vsel %vm290, %v505, 0
        %v882 = vsel %vm290, %v510, 0
        %v885 = vsel %vm290, %v515, 0
        %v888 = vsel %vm290, %v520, 0
        %v891 = vsel %vm290, %v525, 0
        %v894 = vsel %vm290, %v530, 0
        %v897 = vsel %vm290, %v535, 0
        %v900 = vsel %vm290, %v540, 0
        %v903 = vsel %vm290, %v545, 0
        %v906 = vsel %vm290, %v550, 0
        %v909 = vsel %vm290, %v555, 0
        %v912 = vsel %vm290, %v560, 0
        %v915 = vsel %vm290, %v565, 0
        %v918 = vsel %vm290, %v570, 0
        %v921 = vsel %vm290, %v575, 0
        %v924 = vsel %vm290, %v580, 0
        %v927 = vsel %vm290, %v585, 0
        %v930 = vsel %vm290, %v590, 0
        %v933 = vsel %vm290, %v595, 0
        %v936 = vsel %vm290, %v600, 0
        %v939 = vsel %vm290, %v605, 0
        %v942 = vsel %vm290, %v610, 0
        %v945 = vsel %vm290, %v615, 0
        %vm947 = vcmask 1040384
        %v949 = vsel %vm947, %v849, 0
        %v952 = vsel %vm947, %v850, 0
        %954 = vmatprep.subr.mxu0 %v848
        %955 = vmatpush1.msra.mxu0 %v847
        %956 = vmatprep.subr.mxu0 %v952
        %957 = vmatpush1.msra.mxu0 %v949
        %958 = vmatprep.subr.mxu0 0.0
        %959 = vmatpush1.msra.mxu0 0.0
        %960 = vmatprep.subr.mxu0 0.0
        %961 = vmatpush1.msra.mxu0 0.0
        %962 = vmatprep.subr.mxu0 0.0
        %963 = vmatpush1.msra.mxu0 0.0
        %964 = vmatprep.subr.mxu0 0.0
        %965 = vmatpush1.msra.mxu0 0.0
        %966 = vmatprep.subr.mxu0 0.0
        %967 = vmatpush1.msra.mxu0 0.0
        %968 = vmatprep.subr.mxu0 0.0
        %969 = vmatpush1.msra.mxu0 0.0
        %970 = vmatprep.subr.mxu0 0.0
        %971 = vmatpush1.msra.mxu0 0.0
        %972 = vmatprep.subr.mxu0 0.0
        %973 = vmatpush1.msra.mxu0 0.0
        %974 = vmatprep.subr.mxu0 0.0
        %975 = vmatpush1.msra.mxu0 0.0
        %976 = vmatprep.subr.mxu0 0.0
        %977 = vmatpush1.msra.mxu0 0.0
        %978 = vmatprep.subr.mxu0 0.0
        %979 = vmatpush1.msra.mxu0 0.0
        %980 = vmatprep.subr.mxu0 0.0
        %981 = vmatpush1.msra.mxu0 0.0
        %982 = vmatprep.subr.mxu0 0.0
        %983 = vmatpush1.msra.mxu0 0.0
        %984 = vmatprep.subr.mxu0 0.0
        %985 = vmatpush1.msra.mxu0 0.0
        %986 = vmatprep.subr.mxu0 0.0
        %987 = vmatpush1.msra.mxu0 0.0
        %988 = vmatprep.subr.mxu0 0.0
        %989 = vmatpush1.msra.mxu0 0.0
        %990 = vmatprep.subr.mxu0 0.0
        %991 = vmatpush1.msra.mxu0 0.0
        %992 = vmatprep.subr.mxu0 0.0
        %993 = vmatpush1.msra.mxu0 0.0
        %994 = vmatprep.subr.mxu0 0.0
        %995 = vmatpush1.msra.mxu0 0.0
        %996 = vmatprep.subr.mxu0 0.0
        %997 = vmatpush1.msra.mxu0 0.0
        %998 = vmatprep.subr.mxu0 0.0
        %999 = vmatpush1.msra.mxu0 0.0
        %1000 = vmatprep.subr.mxu0 0.0
        %1001 = vmatpush1.msra.mxu0 0.0
        %1002 = vmatprep.subr.mxu0 0.0
        %1003 = vmatpush1.msra.mxu0 0.0
        %1004 = vmatprep.subr.mxu0 0.0
        %1005 = vmatpush1.msra.mxu0 0.0
        %1006 = vmatprep.subr.mxu0 0.0
        %1007 = vmatpush1.msra.mxu0 0.0
        %1008 = vmatprep.subr.mxu0 0.0
        %1009 = vmatpush1.msra.mxu0 0.0
        %1010 = vmatprep.subr.mxu0 0.0
        %1011 = vmatpush1.msra.mxu0 0.0
        %1012 = vmatprep.subr.mxu0 0.0
        %1013 = vmatpush1.msra.mxu0 0.0
        %1014 = vmatprep.subr.mxu0 0.0
        %1015 = vmatpush1.msra.mxu0 0.0
        %1016 = vmatprep.subr.mxu0 0.0
        %1017 = vmatpush1.msra.mxu0 0.0
        %1018 = vmatprep.mubr.f32.mxu0 0.0
        %1019 = vmatmul.mubr.f32.gmra.mrb[0].mxu0 %v852
        %v1020 = vpop.f32.mrb[0].mxu0
        %v1021 = vadd.f32 0.0, %v1020
        %v1022 = vpop.f32.mrb[0].mxu0
        %v1023 = vadd.f32 0.0, %v1022
        %1024 = vmatprep.mubr.f32.mxu0 0.0
        %1025 = vmatmul.mubr.f32.gmra.mrb[0].mxu0 %v855
        %v1026 = vpop.f32.mrb[0].mxu0
        %v1027 = vadd.f32 0.0, %v1026
        %v1028 = vpop.f32.mrb[0].mxu0
        %v1029 = vadd.f32 0.0, %v1028
        %1030 = vmatprep.mubr.f32.mxu0 0.0
        %1031 = vmatmul.mubr.f32.gmra.mrb[0].mxu0 %v858
        %v1032 = vpop.f32.mrb[0].mxu0
        %v1033 = vadd.f32 0.0, %v1032
        %v1034 = vpop.f32.mrb[0].mxu0
        %v1035 = vadd.f32 0.0, %v1034
        %1036 = vmatprep.mubr.f32.mxu0 0.0
        %1037 = vmatmul.mubr.f32.gmra.mrb[0].mxu0 %v861
        %v1038 = vpop.f32.mrb[0].mxu0
        %v1039 = vadd.f32 0.0, %v1038
        %v1040 = vpop.f32.mrb[0].mxu0
        %v1041 = vadd.f32 0.0, %v1040
        %1042 = vmatprep.mubr.f32.mxu0 0.0
        %1043 = vmatmul.mubr.f32.gmra.mrb[0].mxu0 %v864
        %v1044 = vpop.f32.mrb[0].mxu0
        %v1045 = vadd.f32 0.0, %v1044
        %v1046 = vpop.f32.mrb[0].mxu0
        %v1047 = vadd.f32 0.0, %v1046
        %1048 = vmatprep.mubr.f32.mxu0 0.0
        %1049 = vmatmul.mubr.f32.gmra.mrb[0].mxu0 %v867
        %v1050 = vpop.f32.mrb[0].mxu0
        %v1051 = vadd.f32 0.0, %v1050
        %v1052 = vpop.f32.mrb[0].mxu0
        %v1053 = vadd.f32 0.0, %v1052
        %1054 = vmatprep.mubr.f32.mxu0 0.0
        %1055 = vmatmul.mubr.f32.gmra.mrb[0].mxu0 %v870
        %v1056 = vpop.f32.mrb[0].mxu0
        %v1057 = vadd.f32 0.0, %v1056
        %v1058 = vpop.f32.mrb[0].mxu0
        %v1059 = vadd.f32 0.0, %v1058
        %1060 = vmatprep.mubr.f32.mxu0 0.0
        %1061 = vmatmul.mubr.f32.gmra.mrb[0].mxu0 %v873
        %v1062 = vpop.f32.mrb[0].mxu0
        %v1063 = vadd.f32 0.0, %v1062
        %v1064 = vpop.f32.mrb[0].mxu0
        %v1065 = vadd.f32 0.0, %v1064
        %1066 = vmatprep.mubr.f32.mxu0 0.0
        %1067 = vmatmul.mubr.f32.gmra.mrb[0].mxu0 %v876
        %v1068 = vpop.f32.mrb[0].mxu0
        %v1069 = vadd.f32 0.0, %v1068
        %v1070 = vpop.f32.mrb[0].mxu0
        %v1071 = vadd.f32 0.0, %v1070
        %1072 = vmatprep.mubr.f32.mxu0 0.0
        %1073 = vmatmul.mubr.f32.gmra.mrb[0].mxu0 %v879
        %v1074 = vpop.f32.mrb[0].mxu0
        %v1075 = vadd.f32 0.0, %v1074
        %v1076 = vpop.f32.mrb[0].mxu0
        %v1077 = vadd.f32 0.0, %v1076
        %1078 = vmatprep.mubr.f32.mxu0 0.0
        %1079 = vmatmul.mubr.f32.gmra.mrb[0].mxu0 %v882
        %v1080 = vpop.f32.mrb[0].mxu0
        %v1081 = vadd.f32 0.0, %v1080
        %v1082 = vpop.f32.mrb[0].mxu0
        %v1083 = vadd.f32 0.0, %v1082
        %1084 = vmatprep.mubr.f32.mxu0 0.0
        %1085 = vmatmul.mubr.f32.gmra.mrb[0].mxu0 %v885
        %v1086 = vpop.f32.mrb[0].mxu0
        %v1087 = vadd.f32 0.0, %v1086
        %v1088 = vpop.f32.mrb[0].mxu0
        %v1089 = vadd.f32 0.0, %v1088
        %1090 = vmatprep.mubr.f32.mxu0 0.0
        %1091 = vmatmul.mubr.f32.gmra.mrb[0].mxu0 %v888
        %v1092 = vpop.f32.mrb[0].mxu0
        %v1093 = vadd.f32 0.0, %v1092
        %v1094 = vpop.f32.mrb[0].mxu0
        %v1095 = vadd.f32 0.0, %v1094
        %1096 = vmatprep.mubr.f32.mxu0 0.0
        %1097 = vmatmul.mubr.f32.gmra.mrb[0].mxu0 %v891
        %v1098 = vpop.f32.mrb[0].mxu0
        %v1099 = vadd.f32 0.0, %v1098
        %v1100 = vpop.f32.mrb[0].mxu0
        %v1101 = vadd.f32 0.0, %v1100
        %1102 = vmatprep.mubr.f32.mxu0 0.0
        %1103 = vmatmul.mubr.f32.gmra.mrb[0].mxu0 %v894
        %v1104 = vpop.f32.mrb[0].mxu0
        %v1105 = vadd.f32 0.0, %v1104
        %v1106 = vpop.f32.mrb[0].mxu0
        %v1107 = vadd.f32 0.0, %v1106
        %1108 = vmatprep.mubr.f32.mxu0 0.0
        %1109 = vmatmul.mubr.f32.gmra.mrb[0].mxu0 %v897
        %v1110 = vpop.f32.mrb[0].mxu0
        %v1111 = vadd.f32 0.0, %v1110
        %v1112 = vpop.f32.mrb[0].mxu0
        %v1113 = vadd.f32 0.0, %v1112
        %1114 = vmatprep.mubr.f32.mxu0 0.0
        %1115 = vmatmul.mubr.f32.gmra.mrb[0].mxu0 %v900
        %v1116 = vpop.f32.mrb[0].mxu0
        %v1117 = vadd.f32 0.0, %v1116
        %v1118 = vpop.f32.mrb[0].mxu0
        %v1119 = vadd.f32 0.0, %v1118
        %1120 = vmatprep.mubr.f32.mxu0 0.0
        %1121 = vmatmul.mubr.f32.gmra.mrb[0].mxu0 %v903
        %v1122 = vpop.f32.mrb[0].mxu0
        %v1123 = vadd.f32 0.0, %v1122
        %v1124 = vpop.f32.mrb[0].mxu0
        %v1125 = vadd.f32 0.0, %v1124
        %1126 = vmatprep.mubr.f32.mxu0 0.0
        %1127 = vmatmul.mubr.f32.gmra.mrb[0].mxu0 %v906
        %v1128 = vpop.f32.mrb[0].mxu0
        %v1129 = vadd.f32 0.0, %v1128
        %v1130 = vpop.f32.mrb[0].mxu0
        %v1131 = vadd.f32 0.0, %v1130
        %1132 = vmatprep.mubr.f32.mxu0 0.0
        %1133 = vmatmul.mubr.f32.gmra.mrb[0].mxu0 %v909
        %v1134 = vpop.f32.mrb[0].mxu0
        %v1135 = vadd.f32 0.0, %v1134
        %v1136 = vpop.f32.mrb[0].mxu0
        %v1137 = vadd.f32 0.0, %v1136
        %1138 = vmatprep.mubr.f32.mxu0 0.0
        %1139 = vmatmul.mubr.f32.gmra.mrb[0].mxu0 %v912
        %v1140 = vpop.f32.mrb[0].mxu0
        %v1141 = vadd.f32 0.0, %v1140
        %v1142 = vpop.f32.mrb[0].mxu0
        %v1143 = vadd.f32 0.0, %v1142
        %1144 = vmatprep.mubr.f32.mxu0 0.0
        %1145 = vmatmul.mubr.f32.gmra.mrb[0].mxu0 %v915
        %v1146 = vpop.f32.mrb[0].mxu0
        %v1147 = vadd.f32 0.0, %v1146
        %v1148 = vpop.f32.mrb[0].mxu0
        %v1149 = vadd.f32 0.0, %v1148
        %1150 = vmatprep.mubr.f32.mxu0 0.0
        %1151 = vmatmul.mubr.f32.gmra.mrb[0].mxu0 %v918
        %v1152 = vpop.f32.mrb[0].mxu0
        %v1153 = vadd.f32 0.0, %v1152
        %v1154 = vpop.f32.mrb[0].mxu0
        %v1155 = vadd.f32 0.0, %v1154
        %1156 = vmatprep.mubr.f32.mxu0 0.0
        %1157 = vmatmul.mubr.f32.gmra.mrb[0].mxu0 %v921
        %v1158 = vpop.f32.mrb[0].mxu0
        %v1159 = vadd.f32 0.0, %v1158
        %v1160 = vpop.f32.mrb[0].mxu0
        %v1161 = vadd.f32 0.0, %v1160
        %1162 = vmatprep.mubr.f32.mxu0 0.0
        %1163 = vmatmul.mubr.f32.gmra.mrb[0].mxu0 %v924
        %v1164 = vpop.f32.mrb[0].mxu0
        %v1165 = vadd.f32 0.0, %v1164
        %v1166 = vpop.f32.mrb[0].mxu0
        %v1167 = vadd.f32 0.0, %v1166
        %1168 = vmatprep.mubr.f32.mxu0 0.0
        %1169 = vmatmul.mubr.f32.gmra.mrb[0].mxu0 %v927
        %v1170 = vpop.f32.mrb[0].mxu0
        %v1171 = vadd.f32 0.0, %v1170
        %v1172 = vpop.f32.mrb[0].mxu0
        %v1173 = vadd.f32 0.0, %v1172
        %1174 = vmatprep.mubr.f32.mxu0 0.0
        %1175 = vmatmul.mubr.f32.gmra.mrb[0].mxu0 %v930
        %v1176 = vpop.f32.mrb[0].mxu0
        %v1177 = vadd.f32 0.0, %v1176
        %v1178 = vpop.f32.mrb[0].mxu0
        %v1179 = vadd.f32 0.0, %v1178
        %1180 = vmatprep.mubr.f32.mxu0 0.0
        %1181 = vmatmul.mubr.f32.gmra.mrb[0].mxu0 %v933
        %v1182 = vpop.f32.mrb[0].mxu0
        %v1183 = vadd.f32 0.0, %v1182
        %v1184 = vpop.f32.mrb[0].mxu0
        %v1185 = vadd.f32 0.0, %v1184
        %1186 = vmatprep.mubr.f32.mxu0 0.0
        %1187 = vmatmul.mubr.f32.gmra.mrb[0].mxu0 %v936
        %v1188 = vpop.f32.mrb[0].mxu0
        %v1189 = vadd.f32 0.0, %v1188
        %v1190 = vpop.f32.mrb[0].mxu0
        %v1191 = vadd.f32 0.0, %v1190
        %1192 = vmatprep.mubr.f32.mxu0 0.0
        %1193 = vmatmul.mubr.f32.gmra.mrb[0].mxu0 %v939
        %v1194 = vpop.f32.mrb[0].mxu0
        %v1195 = vadd.f32 0.0, %v1194
        %v1196 = vpop.f32.mrb[0].mxu0
        %v1197 = vadd.f32 0.0, %v1196
        %1198 = vmatprep.mubr.f32.mxu0 0.0
        %1199 = vmatmul.mubr.f32.gmra.mrb[0].mxu0 %v942
        %v1200 = vpop.f32.mrb[0].mxu0
        %v1201 = vadd.f32 0.0, %v1200
        %v1202 = vpop.f32.mrb[0].mxu0
        %v1203 = vadd.f32 0.0, %v1202
        %1204 = vmatprep.mubr.f32.mxu0 0.0
        %1205 = vmatmul.mubr.f32.gmra.mrb[0].mxu0 %v945
        %v1206 = vpop.f32.mrb[0].mxu0
        %v1207 = vadd.f32 0.0, %v1206
        %v1208 = vpop.f32.mrb[0].mxu0
        %v1209 = vadd.f32 0.0, %v1208
        %1210 = vdwg.mxu0
        %v1211 = vmax.f32 %v1021, %v1023
        %1212 = vmax.xlane.f32.xlu0 %v1211
        %v1213 = vpop.xlane.xlu0 %1212
        %v1214 = vmax.f32 %v1027, %v1029
        %1215 = vmax.xlane.f32.xlu0 %v1214
        %v1216 = vpop.xlane.xlu0 %1215
        %v1217 = vmax.f32 %v1033, %v1035
        %1218 = vmax.xlane.f32.xlu0 %v1217
        %v1219 = vpop.xlane.xlu0 %1218
        %v1220 = vmax.f32 %v1039, %v1041
        %1221 = vmax.xlane.f32.xlu0 %v1220
        %v1222 = vpop.xlane.xlu0 %1221
        %v1223 = vmax.f32 %v1045, %v1047
        %1224 = vmax.xlane.f32.xlu0 %v1223
        %v1225 = vpop.xlane.xlu0 %1224
        %v1226 = vmax.f32 %v1051, %v1053
        %1227 = vmax.xlane.f32.xlu0 %v1226
        %v1228 = vpop.xlane.xlu0 %1227
        %v1229 = vmax.f32 %v1057, %v1059
        %1230 = vmax.xlane.f32.xlu0 %v1229
        %v1231 = vpop.xlane.xlu0 %1230
        %v1232 = vmax.f32 %v1063, %v1065
        %1233 = vmax.xlane.f32.xlu0 %v1232
        %v1234 = vpop.xlane.xlu0 %1233
        %v1235 = vmax.f32 %v1069, %v1071
        %1236 = vmax.xlane.f32.xlu0 %v1235
        %v1237 = vpop.xlane.xlu0 %1236
        %v1238 = vmax.f32 %v1075, %v1077
        %1239 = vmax.xlane.f32.xlu0 %v1238
        %v1240 = vpop.xlane.xlu0 %1239
        %v1241 = vmax.f32 %v1081, %v1083
        %1242 = vmax.xlane.f32.xlu0 %v1241
        %v1243 = vpop.xlane.xlu0 %1242
        %v1244 = vmax.f32 %v1087, %v1089
        %1245 = vmax.xlane.f32.xlu0 %v1244
        %v1246 = vpop.xlane.xlu0 %1245
        %v1247 = vmax.f32 %v1093, %v1095
        %1248 = vmax.xlane.f32.xlu0 %v1247
        %v1249 = vpop.xlane.xlu0 %1248
        %v1250 = vmax.f32 %v1099, %v1101
        %1251 = vmax.xlane.f32.xlu0 %v1250
        %v1252 = vpop.xlane.xlu0 %1251
        %v1253 = vmax.f32 %v1105, %v1107
        %1254 = vmax.xlane.f32.xlu0 %v1253
        %v1255 = vpop.xlane.xlu0 %1254
        %v1256 = vmax.f32 %v1111, %v1113
        %1257 = vmax.xlane.f32.xlu0 %v1256
        %v1258 = vpop.xlane.xlu0 %1257
        %v1259 = vmax.f32 %v1117, %v1119
        %1260 = vmax.xlane.f32.xlu0 %v1259
        %v1261 = vpop.xlane.xlu0 %1260
        %v1262 = vmax.f32 %v1123, %v1125
        %1263 = vmax.xlane.f32.xlu0 %v1262
        %v1264 = vpop.xlane.xlu0 %1263
        %v1265 = vmax.f32 %v1129, %v1131
        %1266 = vmax.xlane.f32.xlu0 %v1265
        %v1267 = vpop.xlane.xlu0 %1266
        %v1268 = vmax.f32 %v1135, %v1137
        %1269 = vmax.xlane.f32.xlu0 %v1268
        %v1270 = vpop.xlane.xlu0 %1269
        %v1271 = vmax.f32 %v1141, %v1143
        %1272 = vmax.xlane.f32.xlu0 %v1271
        %v1273 = vpop.xlane.xlu0 %1272
        %v1274 = vmax.f32 %v1147, %v1149
        %1275 = vmax.xlane.f32.xlu0 %v1274
        %v1276 = vpop.xlane.xlu0 %1275
        %v1277 = vmax.f32 %v1153, %v1155
        %1278 = vmax.xlane.f32.xlu0 %v1277
        %v1279 = vpop.xlane.xlu0 %1278
        %v1280 = vmax.f32 %v1159, %v1161
        %1281 = vmax.xlane.f32.xlu0 %v1280
        %v1282 = vpop.xlane.xlu0 %1281
        %v1283 = vmax.f32 %v1165, %v1167
        %1284 = vmax.xlane.f32.xlu0 %v1283
        %v1285 = vpop.xlane.xlu0 %1284
        %v1286 = vmax.f32 %v1171, %v1173
        %1287 = vmax.xlane.f32.xlu0 %v1286
        %v1288 = vpop.xlane.xlu0 %1287
        %v1289 = vmax.f32 %v1177, %v1179
        %1290 = vmax.xlane.f32.xlu0 %v1289
        %v1291 = vpop.xlane.xlu0 %1290
        %v1292 = vmax.f32 %v1183, %v1185
        %1293 = vmax.xlane.f32.xlu0 %v1292
        %v1294 = vpop.xlane.xlu0 %1293
        %v1295 = vmax.f32 %v1189, %v1191
        %1296 = vmax.xlane.f32.xlu0 %v1295
        %v1297 = vpop.xlane.xlu0 %1296
        %v1298 = vmax.f32 %v1195, %v1197
        %1299 = vmax.xlane.f32.xlu0 %v1298
        %v1300 = vpop.xlane.xlu0 %1299
        %v1301 = vmax.f32 %v1201, %v1203
        %1302 = vmax.xlane.f32.xlu0 %v1301
        %v1303 = vpop.xlane.xlu0 %1302
        %v1304 = vmax.f32 %v1207, %v1209
        %1305 = vmax.xlane.f32.xlu0 %v1304
        %v1306 = vpop.xlane.xlu0 %1305
        %v1307 = vsub.f32 %v1021, %v1213
        %v1308 = vsub.f32 %v1023, %v1213
        %v1309 = vsub.f32 %v1027, %v1216
        %v1310 = vsub.f32 %v1029, %v1216
        %v1311 = vsub.f32 %v1033, %v1219
        %v1312 = vsub.f32 %v1035, %v1219
        %v1313 = vsub.f32 %v1039, %v1222
        %v1314 = vsub.f32 %v1041, %v1222
        %v1315 = vsub.f32 %v1045, %v1225
        %v1316 = vsub.f32 %v1047, %v1225
        %v1317 = vsub.f32 %v1051, %v1228
        %v1318 = vsub.f32 %v1053, %v1228
        %v1319 = vsub.f32 %v1057, %v1231
        %v1320 = vsub.f32 %v1059, %v1231
        %v1321 = vsub.f32 %v1063, %v1234
        %v1322 = vsub.f32 %v1065, %v1234
        %v1323 = vsub.f32 %v1069, %v1237
        %v1324 = vsub.f32 %v1071, %v1237
        %v1325 = vsub.f32 %v1075, %v1240
        %v1326 = vsub.f32 %v1077, %v1240
        %v1327 = vsub.f32 %v1081, %v1243
        %v1328 = vsub.f32 %v1083, %v1243
        %v1329 = vsub.f32 %v1087, %v1246
        %v1330 = vsub.f32 %v1089, %v1246
        %v1331 = vsub.f32 %v1093, %v1249
        %v1332 = vsub.f32 %v1095, %v1249
        %v1333 = vsub.f32 %v1099, %v1252
        %v1334 = vsub.f32 %v1101, %v1252
        %v1335 = vsub.f32 %v1105, %v1255
        %v1336 = vsub.f32 %v1107, %v1255
        %v1337 = vsub.f32 %v1111, %v1258
        %v1338 = vsub.f32 %v1113, %v1258
        %v1339 = vsub.f32 %v1117, %v1261
        %v1340 = vsub.f32 %v1119, %v1261
        %v1341 = vsub.f32 %v1123, %v1264
        %v1342 = vsub.f32 %v1125, %v1264
        %v1343 = vsub.f32 %v1129, %v1267
        %v1344 = vsub.f32 %v1131, %v1267
        %v1345 = vsub.f32 %v1135, %v1270
        %v1346 = vsub.f32 %v1137, %v1270
        %v1347 = vsub.f32 %v1141, %v1273
        %v1348 = vsub.f32 %v1143, %v1273
        %v1349 = vsub.f32 %v1147, %v1276
        %v1350 = vsub.f32 %v1149, %v1276
        %v1351 = vsub.f32 %v1153, %v1279
        %v1352 = vsub.f32 %v1155, %v1279
        %v1353 = vsub.f32 %v1159, %v1282
        %v1354 = vsub.f32 %v1161, %v1282
        %v1355 = vsub.f32 %v1165, %v1285
        %v1356 = vsub.f32 %v1167, %v1285
        %v1357 = vsub.f32 %v1171, %v1288
        %v1358 = vsub.f32 %v1173, %v1288
        %v1359 = vsub.f32 %v1177, %v1291
        %v1360 = vsub.f32 %v1179, %v1291
        %v1361 = vsub.f32 %v1183, %v1294
        %v1362 = vsub.f32 %v1185, %v1294
        %v1363 = vsub.f32 %v1189, %v1297
        %v1364 = vsub.f32 %v1191, %v1297
        %v1365 = vsub.f32 %v1195, %v1300
        %v1366 = vsub.f32 %v1197, %v1300
        %v1367 = vsub.f32 %v1201, %v1303
        %v1368 = vsub.f32 %v1203, %v1303
        %v1369 = vsub.f32 %v1207, %v1306
        %v1370 = vsub.f32 %v1209, %v1306
        %v1371 = vmul.f32 %v1307, 1.442695
        %v1372 = vpow.pop %v1371
        %v1373 = vmul.f32 %v1308, 1.442695
        %v1374 = vpow.pop %v1373
        %v1375 = vmul.f32 %v1309, 1.442695
        %v1376 = vpow.pop %v1375
        %v1377 = vmul.f32 %v1310, 1.442695
        %v1378 = vpow.pop %v1377
        %v1379 = vmul.f32 %v1311, 1.442695
        %v1380 = vpow.pop %v1379
        %v1381 = vmul.f32 %v1312, 1.442695
        %v1382 = vpow.pop %v1381
        %v1383 = vmul.f32 %v1313, 1.442695
        %v1384 = vpow.pop %v1383
        %v1385 = vmul.f32 %v1314, 1.442695
        %v1386 = vpow.pop %v1385
        %v1387 = vmul.f32 %v1315, 1.442695
        %v1388 = vpow.pop %v1387
        %v1389 = vmul.f32 %v1316, 1.442695
        %v1390 = vpow.pop %v1389
        %v1391 = vmul.f32 %v1317, 1.442695
        %v1392 = vpow.pop %v1391
        %v1393 = vmul.f32 %v1318, 1.442695
        %v1394 = vpow.pop %v1393
        %v1395 = vmul.f32 %v1319, 1.442695
        %v1396 = vpow.pop %v1395
        %v1397 = vmul.f32 %v1320, 1.442695
        %v1398 = vpow.pop %v1397
        %v1399 = vmul.f32 %v1321, 1.442695
        %v1400 = vpow.pop %v1399
        %v1401 = vmul.f32 %v1322, 1.442695
        %v1402 = vpow.pop %v1401
        %v1403 = vmul.f32 %v1323, 1.442695
        %v1404 = vpow.pop %v1403
        %v1405 = vmul.f32 %v1324, 1.442695
        %v1406 = vpow.pop %v1405
        %v1407 = vmul.f32 %v1325, 1.442695
        %v1408 = vpow.pop %v1407
        %v1409 = vmul.f32 %v1326, 1.442695
        %v1410 = vpow.pop %v1409
        %v1411 = vmul.f32 %v1327, 1.442695
        %v1412 = vpow.pop %v1411
        %v1413 = vmul.f32 %v1328, 1.442695
        %v1414 = vpow.pop %v1413
        %v1415 = vmul.f32 %v1329, 1.442695
        %v1416 = vpow.pop %v1415
        %v1417 = vmul.f32 %v1330, 1.442695
        %v1418 = vpow.pop %v1417
        %v1419 = vmul.f32 %v1331, 1.442695
        %v1420 = vpow.pop %v1419
        %v1421 = vmul.f32 %v1332, 1.442695
        %v1422 = vpow.pop %v1421
        %v1423 = vmul.f32 %v1333, 1.442695
        %v1424 = vpow.pop %v1423
        %v1425 = vmul.f32 %v1334, 1.442695
        %v1426 = vpow.pop %v1425
        %v1427 = vmul.f32 %v1335, 1.442695
        %v1428 = vpow.pop %v1427
        %v1429 = vmul.f32 %v1336, 1.442695
        %v1430 = vpow.pop %v1429
        %v1431 = vmul.f32 %v1337, 1.442695
        %v1432 = vpow.pop %v1431
        %v1433 = vmul.f32 %v1338, 1.442695
        %v1434 = vpow.pop %v1433
        %v1435 = vmul.f32 %v1339, 1.442695
        %v1436 = vpow.pop %v1435
        %v1437 = vmul.f32 %v1340, 1.442695
        %v1438 = vpow.pop %v1437
        %v1439 = vmul.f32 %v1341, 1.442695
        %v1440 = vpow.pop %v1439
        %v1441 = vmul.f32 %v1342, 1.442695
        %v1442 = vpow.pop %v1441
        %v1443 = vmul.f32 %v1343, 1.442695
        %v1444 = vpow.pop %v1443
        %v1445 = vmul.f32 %v1344, 1.442695
        %v1446 = vpow.pop %v1445
        %v1447 = vmul.f32 %v1345, 1.442695
        %v1448 = vpow.pop %v1447
        %v1449 = vmul.f32 %v1346, 1.442695
        %v1450 = vpow.pop %v1449
        %v1451 = vmul.f32 %v1347, 1.442695
        %v1452 = vpow.pop %v1451
        %v1453 = vmul.f32 %v1348, 1.442695
        %v1454 = vpow.pop %v1453
        %v1455 = vmul.f32 %v1349, 1.442695
        %v1456 = vpow.pop %v1455
        %v1457 = vmul.f32 %v1350, 1.442695
        %v1458 = vpow.pop %v1457
        %v1459 = vmul.f32 %v1351, 1.442695
        %v1460 = vpow.pop %v1459
        %v1461 = vmul.f32 %v1352, 1.442695
        %v1462 = vpow.pop %v1461
        %v1463 = vmul.f32 %v1353, 1.442695
        %v1464 = vpow.pop %v1463
        %v1465 = vmul.f32 %v1354, 1.442695
        %v1466 = vpow.pop %v1465
        %v1467 = vmul.f32 %v1355, 1.442695
        %v1468 = vpow.pop %v1467
        %v1469 = vmul.f32 %v1356, 1.442695
        %v1470 = vpow.pop %v1469
        %v1471 = vmul.f32 %v1357, 1.442695
        %v1472 = vpow.pop %v1471
        %v1473 = vmul.f32 %v1358, 1.442695
        %v1474 = vpow.pop %v1473
        %v1475 = vmul.f32 %v1359, 1.442695
        %v1476 = vpow.pop %v1475
        %v1477 = vmul.f32 %v1360, 1.442695
        %v1478 = vpow.pop %v1477
        %v1479 = vmul.f32 %v1361, 1.442695
        %v1480 = vpow.pop %v1479
        %v1481 = vmul.f32 %v1362, 1.442695
        %v1482 = vpow.pop %v1481
        %v1483 = vmul.f32 %v1363, 1.442695
        %v1484 = vpow.pop %v1483
        %v1485 = vmul.f32 %v1364, 1.442695
        %v1486 = vpow.pop %v1485
        %v1487 = vmul.f32 %v1365, 1.442695
        %v1488 = vpow.pop %v1487
        %v1489 = vmul.f32 %v1366, 1.442695
        %v1490 = vpow.pop %v1489
        %v1491 = vmul.f32 %v1367, 1.442695
        %v1492 = vpow.pop %v1491
        %v1493 = vmul.f32 %v1368, 1.442695
        %v1494 = vpow.pop %v1493
        %v1495 = vmul.f32 %v1369, 1.442695
        %v1496 = vpow.pop %v1495
        %v1497 = vmul.f32 %v1370, 1.442695
        %v1498 = vpow.pop %v1497
        %v1499 = vadd.f32 %v1372, %v1374
        %1500 = vadd.xlane.f32.xlu0 %v1499
        %v1501 = vpop.xlane.xlu0 %1500
        %v1502 = vadd.f32 %v1376, %v1378
        %1503 = vadd.xlane.f32.xlu0 %v1502
        %v1504 = vpop.xlane.xlu0 %1503
        %v1505 = vadd.f32 %v1380, %v1382
        %1506 = vadd.xlane.f32.xlu0 %v1505
        %v1507 = vpop.xlane.xlu0 %1506
        %v1508 = vadd.f32 %v1384, %v1386
        %1509 = vadd.xlane.f32.xlu0 %v1508
        %v1510 = vpop.xlane.xlu0 %1509
        %v1511 = vadd.f32 %v1388, %v1390
        %1512 = vadd.xlane.f32.xlu0 %v1511
        %v1513 = vpop.xlane.xlu0 %1512
        %v1514 = vadd.f32 %v1392, %v1394
        %1515 = vadd.xlane.f32.xlu0 %v1514
        %v1516 = vpop.xlane.xlu0 %1515
        %v1517 = vadd.f32 %v1396, %v1398
        %1518 = vadd.xlane.f32.xlu0 %v1517
        %v1519 = vpop.xlane.xlu0 %1518
        %v1520 = vadd.f32 %v1400, %v1402
        %1521 = vadd.xlane.f32.xlu0 %v1520
        %v1522 = vpop.xlane.xlu0 %1521
        %v1523 = vadd.f32 %v1404, %v1406
        %1524 = vadd.xlane.f32.xlu0 %v1523
        %v1525 = vpop.xlane.xlu0 %1524
        %v1526 = vadd.f32 %v1408, %v1410
        %1527 = vadd.xlane.f32.xlu0 %v1526
        %v1528 = vpop.xlane.xlu0 %1527
        %v1529 = vadd.f32 %v1412, %v1414
        %1530 = vadd.xlane.f32.xlu0 %v1529
        %v1531 = vpop.xlane.xlu0 %1530
        %v1532 = vadd.f32 %v1416, %v1418
        %1533 = vadd.xlane.f32.xlu0 %v1532
        %v1534 = vpop.xlane.xlu0 %1533
        %v1535 = vadd.f32 %v1420, %v1422
        %1536 = vadd.xlane.f32.xlu0 %v1535
        %v1537 = vpop.xlane.xlu0 %1536
        %v1538 = vadd.f32 %v1424, %v1426
        %1539 = vadd.xlane.f32.xlu0 %v1538
        %v1540 = vpop.xlane.xlu0 %1539
        %v1541 = vadd.f32 %v1428, %v1430
        %1542 = vadd.xlane.f32.xlu0 %v1541
        %v1543 = vpop.xlane.xlu0 %1542
        %v1544 = vadd.f32 %v1432, %v1434
        %1545 = vadd.xlane.f32.xlu0 %v1544
        %v1546 = vpop.xlane.xlu0 %1545
        %v1547 = vadd.f32 %v1436, %v1438
        %1548 = vadd.xlane.f32.xlu0 %v1547
        %v1549 = vpop.xlane.xlu0 %1548
        %v1550 = vadd.f32 %v1440, %v1442
        %1551 = vadd.xlane.f32.xlu0 %v1550
        %v1552 = vpop.xlane.xlu0 %1551
        %v1553 = vadd.f32 %v1444, %v1446
        %1554 = vadd.xlane.f32.xlu0 %v1553
        %v1555 = vpop.xlane.xlu0 %1554
        %v1556 = vadd.f32 %v1448, %v1450
        %1557 = vadd.xlane.f32.xlu0 %v1556
        %v1558 = vpop.xlane.xlu0 %1557
        %v1559 = vadd.f32 %v1452, %v1454
        %1560 = vadd.xlane.f32.xlu0 %v1559
        %v1561 = vpop.xlane.xlu0 %1560
        %v1562 = vadd.f32 %v1456, %v1458
        %1563 = vadd.xlane.f32.xlu0 %v1562
        %v1564 = vpop.xlane.xlu0 %1563
        %v1565 = vadd.f32 %v1460, %v1462
        %1566 = vadd.xlane.f32.xlu0 %v1565
        %v1567 = vpop.xlane.xlu0 %1566
        %v1568 = vadd.f32 %v1464, %v1466
        %1569 = vadd.xlane.f32.xlu0 %v1568
        %v1570 = vpop.xlane.xlu0 %1569
        %v1571 = vadd.f32 %v1468, %v1470
        %1572 = vadd.xlane.f32.xlu0 %v1571
        %v1573 = vpop.xlane.xlu0 %1572
        %v1574 = vadd.f32 %v1472, %v1474
        %1575 = vadd.xlane.f32.xlu0 %v1574
        %v1576 = vpop.xlane.xlu0 %1575
        %v1577 = vadd.f32 %v1476, %v1478
        %1578 = vadd.xlane.f32.xlu0 %v1577
        %v1579 = vpop.xlane.xlu0 %1578
        %v1580 = vadd.f32 %v1480, %v1482
        %1581 = vadd.xlane.f32.xlu0 %v1580
        %v1582 = vpop.xlane.xlu0 %1581
        %v1583 = vadd.f32 %v1484, %v1486
        %1584 = vadd.xlane.f32.xlu0 %v1583
        %v1585 = vpop.xlane.xlu0 %1584
        %v1586 = vadd.f32 %v1488, %v1490
        %1587 = vadd.xlane.f32.xlu0 %v1586
        %v1588 = vpop.xlane.xlu0 %1587
        %v1589 = vadd.f32 %v1492, %v1494
        %1590 = vadd.xlane.f32.xlu0 %v1589
        %v1591 = vpop.xlane.xlu0 %1590
        %v1592 = vadd.f32 %v1496, %v1498
        %1593 = vadd.xlane.f32.xlu0 %v1592
        %v1594 = vpop.xlane.xlu0 %1593
        %v1595 = vrcp.pop %v1501
        %v1596 = vrcp.pop %v1504
        %v1597 = vrcp.pop %v1507
        %v1598 = vrcp.pop %v1510
        %v1599 = vrcp.pop %v1513
        %v1600 = vrcp.pop %v1516
        %v1601 = vrcp.pop %v1519
        %v1602 = vrcp.pop %v1522
        %v1603 = vrcp.pop %v1525
        %v1604 = vrcp.pop %v1528
        %v1605 = vrcp.pop %v1531
        %v1606 = vrcp.pop %v1534
        %v1607 = vrcp.pop %v1537
        %v1608 = vrcp.pop %v1540
        %v1609 = vrcp.pop %v1543
        %v1610 = vrcp.pop %v1546
        %v1611 = vrcp.pop %v1549
        %v1612 = vrcp.pop %v1552
        %v1613 = vrcp.pop %v1555
        %v1614 = vrcp.pop %v1558
        %v1615 = vrcp.pop %v1561
        %v1616 = vrcp.pop %v1564
        %v1617 = vrcp.pop %v1567
        %v1618 = vrcp.pop %v1570
        %v1619 = vrcp.pop %v1573
        %v1620 = vrcp.pop %v1576
        %v1621 = vrcp.pop %v1579
        %v1622 = vrcp.pop %v1582
        %v1623 = vrcp.pop %v1585
        %v1624 = vrcp.pop %v1588
        %v1625 = vrcp.pop %v1591
        %v1626 = vrcp.pop %v1594
        %v1627 = vmul.f32 %v689, %v1595
        %v1628 = vmul.f32 %v694, %v1596
        %v1629 = vmul.f32 %v699, %v1597
        %v1630 = vmul.f32 %v704, %v1598
        %v1631 = vmul.f32 %v709, %v1599
        %v1632 = vmul.f32 %v714, %v1600
        %v1633 = vmul.f32 %v719, %v1601
        %v1634 = vmul.f32 %v724, %v1602
        %v1635 = vmul.f32 %v729, %v1603
        %v1636 = vmul.f32 %v734, %v1604
        %v1637 = vmul.f32 %v739, %v1605
        %v1638 = vmul.f32 %v744, %v1606
        %v1639 = vmul.f32 %v749, %v1607
        %v1640 = vmul.f32 %v754, %v1608
        %v1641 = vmul.f32 %v759, %v1609
        %v1642 = vmul.f32 %v764, %v1610
        %v1643 = vmul.f32 %v769, %v1611
        %v1644 = vmul.f32 %v774, %v1612
        %v1645 = vmul.f32 %v779, %v1613
        %v1646 = vmul.f32 %v784, %v1614
        %v1647 = vmul.f32 %v789, %v1615
        %v1648 = vmul.f32 %v794, %v1616
        %v1649 = vmul.f32 %v799, %v1617
        %v1650 = vmul.f32 %v804, %v1618
        %v1651 = vmul.f32 %v809, %v1619
        %v1652 = vmul.f32 %v814, %v1620
        %v1653 = vmul.f32 %v819, %v1621
        %v1654 = vmul.f32 %v824, %v1622
        %v1655 = vmul.f32 %v829, %v1623
        %v1656 = vmul.f32 %v834, %v1624
        %v1657 = vmul.f32 %v839, %v1625
        %v1658 = vmul.f32 %v844, %v1626
        %v1659 = vld [vmem:[%s203] sm:$0xff]
        %v1660 = vld [vmem:[%s203 + $0x8] sm:$0xff]
        %1661 = vxpose.xlu0.b32.start [1/16] %v1627, 128
        %1662 = vxpose.xlu0.b32.cont [2/16] %v1628, 128
        %1663 = vxpose.xlu0.b32.cont [3/16] %v1629, 128
        %1664 = vxpose.xlu0.b32.cont [4/16] %v1630, 128
        %1665 = vxpose.xlu0.b32.cont [5/16] %v1631, 128
        %1666 = vxpose.xlu0.b32.cont [6/16] %v1632, 128
        %1667 = vxpose.xlu0.b32.cont [7/16] %v1633, 128
        %1668 = vxpose.xlu0.b32.cont [8/16] %v1634, 128
        %1669 = vxpose.xlu0.b32.cont [9/16] %v1635, 128
        %1670 = vxpose.xlu0.b32.cont [10/16] %v1636, 128
        %1671 = vxpose.xlu0.b32.cont [11/16] %v1637, 128
        %1672 = vxpose.xlu0.b32.cont [12/16] %v1638, 128
        %1673 = vxpose.xlu0.b32.cont [13/16] %v1639, 128
        %1674 = vxpose.xlu0.b32.cont [14/16] %v1640, 128
        %1675 = vxpose.xlu0.b32.cont [15/16] %v1641, 128
        %1676 = vxpose.xlu0.b32.end [16/16] %v1642, 128
        %v1677 = vpop.trf.xlu0
        %v1678 = vpop.trf.xlu0
        %v1679 = vpop.trf.xlu0
        %v1680 = vpop.trf.xlu0
        %v1681 = vpop.trf.xlu0
        %v1682 = vpop.trf.xlu0
        %v1683 = vpop.trf.xlu0
        %v1684 = vpop.trf.xlu0
        %v1685 = vpop.trf.xlu0
        %v1686 = vpop.trf.xlu0
        %v1687 = vpop.trf.xlu0
        %v1688 = vpop.trf.xlu0
        %v1689 = vpop.trf.xlu0
        %v1690 = vpop.trf.xlu0
        %v1691 = vpop.trf.xlu0
        %v1692 = vpop.trf.xlu0
        %1693 = vxpose.xlu0.b32.start [1/16] %v1643, 128
        %1694 = vxpose.xlu0.b32.cont [2/16] %v1644, 128
        %1695 = vxpose.xlu0.b32.cont [3/16] %v1645, 128
        %1696 = vxpose.xlu0.b32.cont [4/16] %v1646, 128
        %1697 = vxpose.xlu0.b32.cont [5/16] %v1647, 128
        %1698 = vxpose.xlu0.b32.cont [6/16] %v1648, 128
        %1699 = vxpose.xlu0.b32.cont [7/16] %v1649, 128
        %1700 = vxpose.xlu0.b32.cont [8/16] %v1650, 128
        %1701 = vxpose.xlu0.b32.cont [9/16] %v1651, 128
        %1702 = vxpose.xlu0.b32.cont [10/16] %v1652, 128
        %1703 = vxpose.xlu0.b32.cont [11/16] %v1653, 128
        %1704 = vxpose.xlu0.b32.cont [12/16] %v1654, 128
        %1705 = vxpose.xlu0.b32.cont [13/16] %v1655, 128
        %1706 = vxpose.xlu0.b32.cont [14/16] %v1656, 128
        %1707 = vxpose.xlu0.b32.cont [15/16] %v1657, 128
        %1708 = vxpose.xlu0.b32.end [16/16] %v1658, 128
        %v1709 = vpop.trf.xlu0
        %v1710 = vpop.trf.xlu0
        %v1711 = vpop.trf.xlu0
        %v1712 = vpop.trf.xlu0
        %v1713 = vpop.trf.xlu0
        %v1714 = vpop.trf.xlu0
        %v1715 = vpop.trf.xlu0
        %v1716 = vpop.trf.xlu0
        %v1717 = vpop.trf.xlu0
        %v1718 = vpop.trf.xlu0
        %v1719 = vpop.trf.xlu0
        %v1720 = vpop.trf.xlu0
        %v1721 = vpop.trf.xlu0
        %v1722 = vpop.trf.xlu0
        %v1723 = vpop.trf.xlu0
        %v1724 = vpop.trf.xlu0
        %1725 = vmatprep.subr.mxu0 %v1374
        %1726 = vmatpush1.msra.mxu0 %v1372
        %1727 = vmatprep.subr.mxu0 %v1378
        %1728 = vmatpush1.msra.mxu0 %v1376
        %1729 = vmatprep.subr.mxu0 %v1382
        %1730 = vmatpush1.msra.mxu0 %v1380
        %1731 = vmatprep.subr.mxu0 %v1386
        %1732 = vmatpush1.msra.mxu0 %v1384
        %1733 = vmatprep.subr.mxu0 %v1390
        %1734 = vmatpush1.msra.mxu0 %v1388
        %1735 = vmatprep.subr.mxu0 %v1394
        %1736 = vmatpush1.msra.mxu0 %v1392
        %1737 = vmatprep.subr.mxu0 %v1398
        %1738 = vmatpush1.msra.mxu0 %v1396
        %1739 = vmatprep.subr.mxu0 %v1402
        %1740 = vmatpush1.msra.mxu0 %v1400
        %1741 = vmatprep.subr.mxu0 %v1406
        %1742 = vmatpush1.msra.mxu0 %v1404
        %1743 = vmatprep.subr.mxu0 %v1410
        %1744 = vmatpush1.msra.mxu0 %v1408
        %1745 = vmatprep.subr.mxu0 %v1414
        %1746 = vmatpush1.msra.mxu0 %v1412
        %1747 = vmatprep.subr.mxu0 %v1418
        %1748 = vmatpush1.msra.mxu0 %v1416
        %1749 = vmatprep.subr.mxu0 %v1422
        %1750 = vmatpush1.msra.mxu0 %v1420
        %1751 = vmatprep.subr.mxu0 %v1426
        %1752 = vmatpush1.msra.mxu0 %v1424
        %1753 = vmatprep.subr.mxu0 %v1430
        %1754 = vmatpush1.msra.mxu0 %v1428
        %1755 = vmatprep.subr.mxu0 %v1434
        %1756 = vmatpush1.msra.mxu0 %v1432
        %1757 = vmatprep.subr.mxu0 %v1438
        %1758 = vmatpush1.msra.mxu0 %v1436
        %1759 = vmatprep.subr.mxu0 %v1442
        %1760 = vmatpush1.msra.mxu0 %v1440
        %1761 = vmatprep.subr.mxu0 %v1446
        %1762 = vmatpush1.msra.mxu0 %v1444
        %1763 = vmatprep.subr.mxu0 %v1450
        %1764 = vmatpush1.msra.mxu0 %v1448
        %1765 = vmatprep.subr.mxu0 %v1454
        %1766 = vmatpush1.msra.mxu0 %v1452
        %1767 = vmatprep.subr.mxu0 %v1458
        %1768 = vmatpush1.msra.mxu0 %v1456
        %1769 = vmatprep.subr.mxu0 %v1462
        %1770 = vmatpush1.msra.mxu0 %v1460
        %1771 = vmatprep.subr.mxu0 %v1466
        %1772 = vmatpush1.msra.mxu0 %v1464
        %1773 = vmatprep.subr.mxu0 %v1470
        %1774 = vmatpush1.msra.mxu0 %v1468
        %1775 = vmatprep.subr.mxu0 %v1474
        %1776 = vmatpush1.msra.mxu0 %v1472
        %1777 = vmatprep.subr.mxu0 %v1478
        %1778 = vmatpush1.msra.mxu0 %v1476
        %1779 = vmatprep.subr.mxu0 %v1482
        %1780 = vmatpush1.msra.mxu0 %v1480
        %1781 = vmatprep.subr.mxu0 %v1486
        %1782 = vmatpush1.msra.mxu0 %v1484
        %1783 = vmatprep.subr.mxu0 %v1490
        %1784 = vmatpush1.msra.mxu0 %v1488
        %1785 = vmatprep.subr.mxu0 %v1494
        %1786 = vmatpush1.msra.mxu0 %v1492
        %1787 = vmatprep.subr.mxu0 %v1498
        %1788 = vmatpush1.msra.mxu0 %v1496
        %1789 = vmatprep.mubr.f32.mxu0 %v1709
        %1790 = vmatmul.mubr.f32.gmra.mrb[0].mxu0 %v1677
        %v1791 = vpop.f32.mrb[0].mxu0
        %v1792 = vadd.f32 0.0, %v1791
        %v1793 = vpop.f32.mrb[0].mxu0
        %v1794 = vadd.f32 0.0, %v1793
        %1795 = vdwg.mxu0
        %v1796 = vadd.f32 %v1659, %v1792
        %v1797 = vadd.f32 %v1660, %v1794
        %1798 = vst [vmem:[%s203] sm:$0xff] %v1796
        %1799 = vst [vmem:[%s203 + $0x8] sm:$0xff] %v1797
        // Predicated region
        $region41: #{tpu_custom_call.1} parent=35 // pred_check
          %p1800 = pneg %p209
        $region42: #{tpu_custom_call.1} parent=35 // pred_check_branch
          %1802 = sbr.rel (%p1800) target = $region44
        $region43: #{tpu_custom_call.1} parent=35 // pred_region
          %s1803 = sld [smem:[#allocation2]]
          %v1804 = vld [vmem:[%s203] sm:$0xff]
          %v1805 = vld [vmem:[%s203 + $0x8] sm:$0xff]
          %v1806 = vstv %s1803
          %v1807 = vmul.f32 %v1806, %v1804
          %v1808 = vmul.f32 %v1806, %v1805
          %v1809 = vld [vmem:[%s208] sm:$0xff]
          %v1810 = vld [vmem:[%s208 + $0x8] sm:$0xff]
          %v1811 = vadd.f32 %v1807, %v1809
          %v1812 = vadd.f32 %v1808, %v1810
          %1813 = vst [vmem:[%s203] sm:$0xff] %v1811
          %1814 = vst [vmem:[%s203 + $0x8] sm:$0xff] %v1812
        $region44: #{tpu_custom_call.1} parent=35 // pred_fallthru
          _
        %s1815 = sand.u32 %s128, 1
        %s1816 = scalar_lea.sflag [#allocation4], %s1815
        %s1817 = sand.u32 %s128, 1
        %s1818 = smul.addr %s1817, 16
        %s1819 = scalar_lea.vmem [#allocation3], %s1818
        // Predicated region
        $region45: #{tpu_custom_call.1} parent=35 // pred_check
          %p1820 = pneg %p138
        $region46: #{tpu_custom_call.1} parent=35 // pred_check_branch
          %1822 = sbr.rel (%p1820) target = $region48
        $region47: #{tpu_custom_call.1} parent=35 // pred_region
          %s1824 = ssub.s32 256, 256
          %1825 = vsyncadd %s1816, %s1824
          %s1826 = smul.addr %s23, 2
          %s1827 = smul.addr %s1826, 128
          %s1828 = scalar_lea.hbm %s4, %s1827
          %s1830 = sshll.u32 %s1819, 4
          %s1831 = int_to_ptr.vmem [resolvable:$true] %s1830
          %1833 = dma.vmem_to_hbm [thread:$0]  %s1831, 256, %s1828, %s1816
        $region48: #{tpu_custom_call.1} parent=35 // pred_fallthru
          _
      $region36: #{tpu_custom_call.1} parent=5 // pred_fallthru
        _
      %p1834 = scmp.le.s32.totalorder 2, %s14
      // Predicated region
      $region49: #{tpu_custom_call.1} parent=5 // pred_check
        %p1835 = pneg %p1834
      $region50: #{tpu_custom_call.1} parent=5 // pred_check_branch
        %1837 = sbr.rel (%p1835) target = $region52
      $region51: #{tpu_custom_call.1} parent=5 // pred_region
        %s1838 = ssub.s32 %s14, 2
        // Predicated region
        $region53: #{tpu_custom_call.1} parent=51 // pred_check
          %p1839 = pneg %p144
        $region54: #{tpu_custom_call.1} parent=51 // pred_check_branch
          %1841 = sbr.rel (%p1839) target = $region56
        $region55: #{tpu_custom_call.1} parent=51 // pred_region
          %s1842 = sand.u32 %s129, 1
          %s1843 = scalar_lea.sflag [#allocation4], %s1842
          %s1844 = sand.u32 %s129, 1
          %s1845 = smul.addr %s1844, 16
          %s1846 = scalar_lea.vmem [#allocation3], %s1845
          %1847 = dma.done %s1843, 256
        $region56: #{tpu_custom_call.1} parent=51 // pred_fallthru
          _
      $region52: #{tpu_custom_call.1} parent=5 // pred_fallthru
        _
    $region6: #{tpu_custom_call.1} parent=1 // loop_footer
      %s18 = sadd.s32 1, %s14
    $region7: #{tpu_custom_call.1} parent=1 // loop_footer_branch
      %13 = sbr.rel target = $region3
    $region8: #{tpu_custom_call.1} parent=1 // loop_exit
      _
    %1848 = vsyncpa [#allocation4], 1
    %s1849 = scalar_lea.sflag [#allocation4], 1
    %1850 = vsyncpa %s1849, 1

</llo_original>
